<compile_context>
chip_gen: v6e
topology: v6e:2x2x1
jax: 0.10.0
libtpu: 0.0.40
codegen_flags: <defaults>
</compile_context>

<pallas_src>
import numpy as np
import jax
import jax.numpy as jnp
from jax import lax
from jax.experimental import pallas as pl
from jax.experimental.pallas import tpu as pltpu

# ----- HP hyperparameters from the original module -----
EMBED_SIZE = 32
POS_WEIGHT_EXTRA = 1.5
FOCAL_LOSS = False     # HP.FOCAL_LOSS (focal branch disabled, like the default)

# ----- synthetic derivation-DAG sizes -----
N_NODES = 16   # len(data['ids'])     -> rows of the `vectors` table
N_THAX = 6     # len(data['thax'])    -> nodes with an initial embedding
N_STEPS = 4    # len(data['rule_steps'])
K_DERIV = 2    # nodes derived per step (uniform in this synthetic instance)
M_MASK = 8     # sum(data['mask'])    -> rows fed to eval_net
OUT_LANES = 8  # packed outputs: lane0=loss, lane1=posOK, lane2=negOK


def _learning_model_kernel(
    # scalar-prefetch (SMEM) refs
    ind_ref,        # [S, K]    int32 : nodes written at each step
    pars_ref,       # [S, K, 2] int32 : two parents of each derived node
    midx_ref,       # [M]       int32 : indices where mask == True
    # VMEM inputs (all resident for the single invocation)
    vec_init_ref,   # [N, E]    initial `vectors` table (first T rows = init_embeds)
    w_ref,          # [S, 2E, E] fused per-step deriv-MLP weight ([W0;W1] stacked)
    b_ref,          # [S, 1, E]
    lim_ref,        # [S, K, 1] rule-52 limits (zero for other rules)
    w_eval_ref,     # [E, 1]
    b_eval_ref,     # [1, 1]
    pos_ref,        # [M, 1]
    neg_ref,        # [M, 1]
    tgt_ref,        # [M, 1]
    posw_ref,       # [1, 1]
    # output
    out_ref,        # [1, OUT_LANES]: lane0=loss, lane1=posOK, lane2=negOK
):
    N, E = vec_init_ref.shape
    S, K = ind_ref.shape
    M = midx_ref.shape[0]

    # live clause-embedding table held as a value (fits in a few vregs here)
    vec = vec_init_ref[...]

    node_row = lax.broadcasted_iota(jnp.int32, (N, 1), 0)     # for scatter masks
    g_row = lax.broadcasted_iota(jnp.int32, (2 * K, N), 0)    # for gather one-hots
    g_col = lax.broadcasted_iota(jnp.int32, (2 * K, N), 1)

    # ---- sequential derivation: fully unrolled in-kernel loop over steps ----
    for s in range(S):
        # one-hot gather matrix: rows 0..K-1 pick parent0, rows K..2K-1 parent1
        pid = jnp.zeros((2 * K, N), jnp.int32)
        for j in range(K):
            pid = jnp.where(g_row == j, pars_ref[s, j, 0], pid)
            pid = jnp.where(g_row == K + j, pars_ref[s, j, 1], pid)
        onehot = (g_col == pid).astype(jnp.float32)                        # [2K, N]
        gathered = jnp.dot(onehot, vec, preferred_element_type=jnp.float32)  # [2K, E]
        x = jnp.concatenate([gathered[:K], gathered[K:]], axis=-1)         # [K, 2E]

        # fused deriv MLP: relu([p0 ; p1] @ W + b) (+ additive rule-52 limit term)
        # TODO(synk): the exact rule-52 MLP using `rule_52_limits` is not defined
        #             in the snippet; modelled as a per-derived-node additive scalar.
        y = jnp.dot(x, w_ref[s], preferred_element_type=jnp.float32) + b_ref[s]
        y = jnp.maximum(y, 0.0) + lim_ref[s]                               # [K, E]

        # vectorized scatter of the freshly derived embeddings into the table
        for j in range(K):
            vec = jnp.where(node_row == ind_ref[s, j], y[j:j + 1, :], vec)

    # ---- contribute(): eval_net + weighted BCE-with-logits ----
    m_row = lax.broadcasted_iota(jnp.int32, (M, N), 0)
    m_col = lax.broadcasted_iota(jnp.int32, (M, N), 1)
    mid = jnp.zeros((M, N), jnp.int32)
    for m in range(M):
        mid = jnp.where(m_row == m, midx_ref[m], mid)
    oh_mask = (m_col == mid).astype(jnp.float32)                           # [M, N]
    ev = jnp.dot(oh_mask, vec, preferred_element_type=jnp.float32)         # [M, E]

    val = (jnp.dot(ev, w_eval_ref[...], preferred_element_type=jnp.float32)
           + b_eval_ref[...])                                              # [M, 1] logits

    pos = pos_ref[...]
    neg = neg_ref[...]
    tgt = tgt_ref[...]
    pw = posw_ref[...]                                                     # [1,1]

    posok = jnp.sum(pos * (val >= 0.0).astype(jnp.float32), keepdims=True)  # (1,1)
    negok = jnp.sum(neg * (val < 0.0).astype(jnp.float32), keepdims=True)   # (1,1)

    def softplus(z):  # numerically stable
        return jnp.maximum(z, 0.0) + jnp.log(1.0 + jnp.exp(-jnp.abs(z)))

    # BCEWithLogitsLoss(pos_weight, reduction='none'):
    #   pw * t * softplus(-x) + (1 - t) * softplus(x)
    contrib = pw * tgt * softplus(-val) + (1.0 - tgt) * softplus(val)
    # TODO(synk): HP.FOCAL_LOSS branch not implemented (disabled by default).
    loss = jnp.sum((pos + neg) * contrib, keepdims=True)                   # (1,1)

    lane = lax.broadcasted_iota(jnp.int32, (1, OUT_LANES), 1)
    out_ref[...] = jnp.where(lane == 0, loss,
                    jnp.where(lane == 1, posok,
                     jnp.where(lane == 2, negok, jnp.zeros_like(loss))))


def learning_model_forward(vec_init, ind, pars, midx,
                           w_steps, b_steps, lim_steps,
                           w_eval, b_eval, pos, neg, target, pos_weight):
    S, K = ind.shape
    N, E = vec_init.shape
    M = midx.shape[0]
    assert K == K_DERIV and M == M_MASK and E == EMBED_SIZE

    grid_spec = pltpu.PrefetchScalarGridSpec(
        num_scalar_prefetch=3,
        grid=(1,),   # single invocation: the S-step loop is unrolled in-kernel
        in_specs=[
            pl.BlockSpec((N, E), lambda i, *_: (0, 0)),              # vec_init
            pl.BlockSpec((S, 2 * E, E), lambda i, *_: (0, 0, 0)),    # fused W per step
            pl.BlockSpec((S, 1, E), lambda i, *_: (0, 0, 0)),        # b per step
            pl.BlockSpec((S, K, 1), lambda i, *_: (0, 0, 0)),        # rule-52 limits
            pl.BlockSpec((E, 1), lambda i, *_: (0, 0)),              # w_eval
            pl.BlockSpec((1, 1), lambda i, *_: (0, 0)),              # b_eval
            pl.BlockSpec((M, 1), lambda i, *_: (0, 0)),              # pos
            pl.BlockSpec((M, 1), lambda i, *_: (0, 0)),              # neg
            pl.BlockSpec((M, 1), lambda i, *_: (0, 0)),              # target
            pl.BlockSpec((1, 1), lambda i, *_: (0, 0)),              # pos_weight
        ],
        out_specs=pl.BlockSpec((1, OUT_LANES), lambda i, *_: (0, 0)),
    )
    out = pl.pallas_call(
        _learning_model_kernel,
        grid_spec=grid_spec,
        out_shape=jax.ShapeDtypeStruct((1, OUT_LANES), jnp.float32),
        compiler_params=pltpu.CompilerParams(
            dimension_semantics=("arbitrary",)),
    )(ind, pars, midx,
      vec_init, w_steps, b_steps, lim_steps,
      w_eval, b_eval, pos, neg, target, pos_weight)
    return out[0, 0], out[0, 1], out[0, 2]


if __name__ == "__main__":
    E, N, T, S, K, M = EMBED_SIZE, N_NODES, N_THAX, N_STEPS, K_DERIV, M_MASK

    key = jax.random.PRNGKey(0)
    ks = jax.random.split(key, 8)
    rng = np.random.RandomState(0)

    # initial embeddings: vectors[:len(thax)] = stack(init_embeds[thax]())
    vec_init = jnp.zeros((N, E), jnp.float32)
    vec_init = vec_init.at[:T].set(0.1 * jax.random.normal(ks[0], (T, E), jnp.float32))

    # derivation schedule: rule per step, derived-node indices, parent indices
    rule_steps = [1, 52, 1, 52]
    ind_np = np.zeros((S, K), np.int32)
    pars_np = np.zeros((S, K, 2), np.int32)
    for s in range(S):
        first = T + s * K
        ind_np[s] = np.arange(first, first + K)
        pars_np[s] = rng.randint(0, first, size=(K, 2))   # parents already built
    ind = jnp.asarray(ind_np)
    pars = jnp.asarray(pars_np)

    # per-rule deriv-MLP parameters; stacked per step on the host, mirroring the
    # python-level dispatch on rule_steps[step].item() in the torch forward().
    rule_params = {}
    for r in sorted(set(rule_steps)):
        kr = jax.random.split(jax.random.fold_in(key, 100 + r), 3)
        rule_params[r] = (
            (1.0 / np.sqrt(2 * E)) * jax.random.normal(kr[0], (E, E), jnp.float32),
            (1.0 / np.sqrt(2 * E)) * jax.random.normal(kr[1], (E, E), jnp.float32),
            0.01 * jax.random.normal(kr[2], (1, E), jnp.float32),
        )
    # fused per-step weight: W = [W0 ; W1] stacked on the contraction axis -> [2E, E]
    w_steps = jnp.stack([jnp.concatenate([rule_params[r][0], rule_params[r][1]], axis=0)
                         for r in rule_steps])                      # [S, 2E, E]
    b_steps = jnp.stack([rule_params[r][2] for r in rule_steps])    # [S, 1, E]

    lim_np = np.zeros((S, K, 1), np.float32)
    for s, r in enumerate(rule_steps):
        if r == 52:
            lim_np[s] = rng.uniform(-0.2, 0.2, size=(K, 1)).astype(np.float32)
    lim_steps = jnp.asarray(lim_np)

    # eval_net = Linear(EMBED_SIZE, 1)
    w_eval = (1.0 / np.sqrt(E)) * jax.random.normal(ks[1], (E, 1), jnp.float32)
    b_eval = jnp.zeros((1, 1), jnp.float32)

    # mask / pos / neg / target / pos_weight
    midx = jnp.asarray(np.arange(T, T + M, dtype=np.int32))   # mask == derived nodes
    pos = jnp.asarray(rng.randint(0, 3, size=(M, 1)).astype(np.float32))
    neg = jnp.asarray(rng.randint(0, 3, size=(M, 1)).astype(np.float32))
    target = jnp.asarray((rng.rand(M, 1) > 0.5).astype(np.float32))
    tot_pos, tot_neg = float(pos.sum()), float(neg.sum())
    pw = POS_WEIGHT_EXTRA * tot_neg / tot_pos if tot_pos > 0 else 1.0
    pos_weight = jnp.full((1, 1), pw, jnp.float32)

    loss, posok, negok = jax.block_until_ready(
        jax.jit(learning_model_forward)(
            vec_init, ind, pars, midx,
            w_steps, b_steps, lim_steps,
            w_eval, b_eval, pos, neg, target, pos_weight))

    # ---- pure-numpy reference check ----
    vec = np.array(vec_init)
    W, B, L = map(np.array, (w_steps, b_steps, lim_steps))
    for s in range(S):
        p0 = vec[pars_np[s, :, 0]]
        p1 = vec[pars_np[s, :, 1]]
        x = np.concatenate([p0, p1], axis=-1)
        y = np.maximum(x @ W[s] + B[s], 0.0) + L[s]
        vec[ind_np[s]] = y
    val = vec[np.array(midx)] @ np.array(w_eval) + np.array(b_eval)
    posv, negv, t = map(np.array, (pos, neg, target))
    ref_pos = (posv * (val >= 0)).sum()
    ref_neg = (negv * (val < 0)).sum()
    sp = lambda x: np.maximum(x, 0) + np.log1p(np.exp(-np.abs(x)))
    ref_loss = ((posv + negv) * (pw * t * sp(-val) + (1 - t) * sp(val))).sum()

    assert abs(float(loss) - float(ref_loss)) < 1e-3 * max(1.0, abs(float(ref_loss)))
    assert abs(float(posok) - float(ref_pos)) < 1e-4
    assert abs(float(negok) - float(ref_neg)) < 1e-4
    print("KERNEL_OK")
</pallas_src>

<mosaic_0001>
module attributes {stable_mosaic.version = 11 : i64} {
  func.func @_learning_model_kernel(%arg0: i32, %arg1: memref<4x2xi32, #tpu.memory_space<smem>>, %arg2: memref<4x2x2xi32, #tpu.memory_space<smem>>, %arg3: memref<8xi32, #tpu.memory_space<smem>>, %arg4: memref<16x32xf32, #tpu.memory_space<vmem>>, %arg5: memref<4x64x32xf32, #tpu.memory_space<vmem>>, %arg6: memref<4x1x32xf32, #tpu.memory_space<vmem>>, %arg7: memref<4x2x1xf32, #tpu.memory_space<vmem>>, %arg8: memref<32x1xf32, #tpu.memory_space<vmem>>, %arg9: memref<1x1xf32, #tpu.memory_space<vmem>>, %arg10: memref<8x1xf32, #tpu.memory_space<vmem>>, %arg11: memref<8x1xf32, #tpu.memory_space<vmem>>, %arg12: memref<8x1xf32, #tpu.memory_space<vmem>>, %arg13: memref<1x1xf32, #tpu.memory_space<vmem>>, %arg14: memref<1x8xf32, #tpu.memory_space<vmem>>) attributes {dimension_semantics = [#tpu.dimension_semantics<arbitrary>], iteration_bounds = array<i64: 1>, scalar_prefetch = 3 : i64, scratch_operands = 0 : i64, tpu.core_type = #tpu.core_type<tc>, window_params = [{pipeline_mode = #tpu.pipeline_mode<synchronous>, transform_indices = @transform_0, window_bounds = array<i64: 16, 32>}, {pipeline_mode = #tpu.pipeline_mode<synchronous>, transform_indices = @transform_1, window_bounds = array<i64: 4, 64, 32>}, {pipeline_mode = #tpu.pipeline_mode<synchronous>, transform_indices = @transform_2, window_bounds = array<i64: 4, 1, 32>}, {pipeline_mode = #tpu.pipeline_mode<synchronous>, transform_indices = @transform_3, window_bounds = array<i64: 4, 2, 1>}, {pipeline_mode = #tpu.pipeline_mode<synchronous>, transform_indices = @transform_4, window_bounds = array<i64: 32, 1>}, {pipeline_mode = #tpu.pipeline_mode<synchronous>, transform_indices = @transform_5, window_bounds = array<i64: 1, 1>}, {pipeline_mode = #tpu.pipeline_mode<synchronous>, transform_indices = @transform_6, window_bounds = array<i64: 8, 1>}, {pipeline_mode = #tpu.pipeline_mode<synchronous>, transform_indices = @transform_7, window_bounds = array<i64: 8, 1>}, {pipeline_mode = #tpu.pipeline_mode<synchronous>, transform_indices = @transform_8, window_bounds = array<i64: 8, 1>}, {pipeline_mode = #tpu.pipeline_mode<synchronous>, transform_indices = @transform_9, window_bounds = array<i64: 1, 1>}, {pipeline_mode = #tpu.pipeline_mode<synchronous>, transform_indices = @transform_10, window_bounds = array<i64: 1, 8>}]} {
    %c0 = arith.constant 0 : index
    %c0_0 = arith.constant 0 : index
    %0 = vector.load %arg4[%c0, %c0_0] : memref<16x32xf32, #tpu.memory_space<vmem>>, vector<16x32xf32>
    %1 = tpu.iota {dimensions = array<i32: 0>} : vector<16x1xi32>
    %2 = tpu.iota {dimensions = array<i32: 0>} : vector<4x16xi32>
    %3 = tpu.iota {dimensions = array<i32: 1>} : vector<4x16xi32>
    %c0_i32 = arith.constant 0 : i32
    %4 = vector.broadcast %c0_i32 : i32 to vector<4x16xi32>
    %c0_i32_1 = arith.constant 0 : i32
    %5 = vector.broadcast %c0_i32_1 : i32 to vector<4x16xi32>
    %6 = arith.cmpi eq, %2, %5 : vector<4x16xi32>
    %c0_2 = arith.constant 0 : index
    %c0_3 = arith.constant 0 : index
    %c0_4 = arith.constant 0 : index
    %7 = memref.load %arg2[%c0_2, %c0_3, %c0_4] : memref<4x2x2xi32, #tpu.memory_space<smem>>
    %8 = vector.broadcast %7 : i32 to vector<4x16xi32>
    %9 = arith.select %6, %8, %4 : vector<4x16xi1>, vector<4x16xi32>
    %c2_i32 = arith.constant 2 : i32
    %10 = vector.broadcast %c2_i32 : i32 to vector<4x16xi32>
    %11 = arith.cmpi eq, %2, %10 : vector<4x16xi32>
    %c0_5 = arith.constant 0 : index
    %c0_6 = arith.constant 0 : index
    %c1 = arith.constant 1 : index
    %12 = memref.load %arg2[%c0_5, %c0_6, %c1] : memref<4x2x2xi32, #tpu.memory_space<smem>>
    %13 = vector.broadcast %12 : i32 to vector<4x16xi32>
    %14 = arith.select %11, %13, %9 : vector<4x16xi1>, vector<4x16xi32>
    %c1_i32 = arith.constant 1 : i32
    %15 = vector.broadcast %c1_i32 : i32 to vector<4x16xi32>
    %16 = arith.cmpi eq, %2, %15 : vector<4x16xi32>
    %c0_7 = arith.constant 0 : index
    %c1_8 = arith.constant 1 : index
    %c0_9 = arith.constant 0 : index
    %17 = memref.load %arg2[%c0_7, %c1_8, %c0_9] : memref<4x2x2xi32, #tpu.memory_space<smem>>
    %18 = vector.broadcast %17 : i32 to vector<4x16xi32>
    %19 = arith.select %16, %18, %14 : vector<4x16xi1>, vector<4x16xi32>
    %c3_i32 = arith.constant 3 : i32
    %20 = vector.broadcast %c3_i32 : i32 to vector<4x16xi32>
    %21 = arith.cmpi eq, %2, %20 : vector<4x16xi32>
    %c0_10 = arith.constant 0 : index
    %c1_11 = arith.constant 1 : index
    %c1_12 = arith.constant 1 : index
    %22 = memref.load %arg2[%c0_10, %c1_11, %c1_12] : memref<4x2x2xi32, #tpu.memory_space<smem>>
    %23 = vector.broadcast %22 : i32 to vector<4x16xi32>
    %24 = arith.select %21, %23, %19 : vector<4x16xi1>, vector<4x16xi32>
    %25 = arith.cmpi eq, %3, %24 : vector<4x16xi32>
    %26 = arith.extui %25 : vector<4x16xi1> to vector<4x16xi32>
    %27 = arith.sitofp %26 : vector<4x16xi32> to vector<4x16xf32>
    %cst = arith.constant dense<0.000000e+00> : vector<4x32xf32>
    %28 = tpu.matmul %27, %0, %cst {dimension_numbers = #tpu.dot_dimension_numbers<[1], [0], [0], [1], [0, 0, 1, 1], [], []>} : vector<4x16xf32>, vector<16x32xf32>, vector<4x32xf32> -> vector<4x32xf32>
    %29 = vector.extract_strided_slice %28 {offsets = [0, 0], sizes = [2, 32], strides = [1, 1]} : vector<4x32xf32> to vector<2x32xf32>
    %30 = vector.extract_strided_slice %28 {offsets = [2, 0], sizes = [2, 32], strides = [1, 1]} : vector<4x32xf32> to vector<2x32xf32>
    %31 = tpu.concatenate %29, %30 in 1 : vector<2x32xf32>, vector<2x32xf32> -> vector<2x64xf32>
    %c0_13 = arith.constant 0 : index
    %c0_14 = arith.constant 0 : index
    %c0_15 = arith.constant 0 : index
    %32 = vector.load %arg5[%c0_13, %c0_14, %c0_15] : memref<4x64x32xf32, #tpu.memory_space<vmem>>, vector<1x64x32xf32>
    %33 = vector.shape_cast %32 : vector<1x64x32xf32> to vector<64x32xf32>
    %cst_16 = arith.constant dense<0.000000e+00> : vector<2x32xf32>
    %34 = tpu.matmul %31, %33, %cst_16 {dimension_numbers = #tpu.dot_dimension_numbers<[1], [0], [0], [1], [0, 0, 1, 1], [], []>} : vector<2x64xf32>, vector<64x32xf32>, vector<2x32xf32> -> vector<2x32xf32>
    %c0_17 = arith.constant 0 : index
    %c0_18 = arith.constant 0 : index
    %c0_19 = arith.constant 0 : index
    %35 = vector.load %arg6[%c0_17, %c0_18, %c0_19] : memref<4x1x32xf32, #tpu.memory_space<vmem>>, vector<1x1x32xf32>
    %36 = vector.shape_cast %35 : vector<1x1x32xf32> to vector<1x32xf32>
    %37 = vector.broadcast %36 : vector<1x32xf32> to vector<2x32xf32>
    %38 = arith.addf %34, %37 : vector<2x32xf32>
    %cst_20 = arith.constant 0.000000e+00 : f32
    %39 = vector.broadcast %cst_20 : f32 to vector<2x32xf32>
    %40 = arith.maximumf %38, %39 : vector<2x32xf32>
    %c0_21 = arith.constant 0 : index
    %c0_22 = arith.constant 0 : index
    %c0_23 = arith.constant 0 : index
    %41 = vector.load %arg7[%c0_21, %c0_22, %c0_23] : memref<4x2x1xf32, #tpu.memory_space<vmem>>, vector<1x2x1xf32>
    %42 = vector.shape_cast %41 : vector<1x2x1xf32> to vector<2x1xf32>
    %43 = vector.broadcast %42 : vector<2x1xf32> to vector<2x32xf32>
    %44 = arith.addf %40, %43 : vector<2x32xf32>
    %c0_24 = arith.constant 0 : index
    %c0_25 = arith.constant 0 : index
    %45 = memref.load %arg1[%c0_24, %c0_25] : memref<4x2xi32, #tpu.memory_space<smem>>
    %46 = vector.broadcast %45 : i32 to vector<16x1xi32>
    %47 = arith.cmpi eq, %1, %46 : vector<16x1xi32>
    %48 = vector.extract_strided_slice %44 {offsets = [0, 0], sizes = [1, 32], strides = [1, 1]} : vector<2x32xf32> to vector<1x32xf32>
    %49 = vector.shape_cast %47 : vector<16x1xi1> to vector<16x1xi1>
    %50 = vector.broadcast %49 : vector<16x1xi1> to vector<16x32xi1>
    %51 = vector.shape_cast %48 : vector<1x32xf32> to vector<1x32xf32>
    %52 = vector.broadcast %51 : vector<1x32xf32> to vector<16x32xf32>
    %53 = arith.select %50, %52, %0 : vector<16x32xi1>, vector<16x32xf32>
    %c0_26 = arith.constant 0 : index
    %c1_27 = arith.constant 1 : index
    %54 = memref.load %arg1[%c0_26, %c1_27] : memref<4x2xi32, #tpu.memory_space<smem>>
    %55 = vector.broadcast %54 : i32 to vector<16x1xi32>
    %56 = arith.cmpi eq, %1, %55 : vector<16x1xi32>
    %57 = vector.extract_strided_slice %44 {offsets = [1, 0], sizes = [1, 32], strides = [1, 1]} : vector<2x32xf32> to vector<1x32xf32>
    %58 = vector.shape_cast %56 : vector<16x1xi1> to vector<16x1xi1>
    %59 = vector.broadcast %58 : vector<16x1xi1> to vector<16x32xi1>
    %60 = vector.shape_cast %57 : vector<1x32xf32> to vector<1x32xf32>
    %61 = vector.broadcast %60 : vector<1x32xf32> to vector<16x32xf32>
    %62 = arith.select %59, %61, %53 : vector<16x32xi1>, vector<16x32xf32>
    %c0_i32_28 = arith.constant 0 : i32
    %63 = vector.broadcast %c0_i32_28 : i32 to vector<4x16xi32>
    %c0_i32_29 = arith.constant 0 : i32
    %64 = vector.broadcast %c0_i32_29 : i32 to vector<4x16xi32>
    %65 = arith.cmpi eq, %2, %64 : vector<4x16xi32>
    %c1_30 = arith.constant 1 : index
    %c0_31 = arith.constant 0 : index
    %c0_32 = arith.constant 0 : index
    %66 = memref.load %arg2[%c1_30, %c0_31, %c0_32] : memref<4x2x2xi32, #tpu.memory_space<smem>>
    %67 = vector.broadcast %66 : i32 to vector<4x16xi32>
    %68 = arith.select %65, %67, %63 : vector<4x16xi1>, vector<4x16xi32>
    %c2_i32_33 = arith.constant 2 : i32
    %69 = vector.broadcast %c2_i32_33 : i32 to vector<4x16xi32>
    %70 = arith.cmpi eq, %2, %69 : vector<4x16xi32>
    %c1_34 = arith.constant 1 : index
    %c0_35 = arith.constant 0 : index
    %c1_36 = arith.constant 1 : index
    %71 = memref.load %arg2[%c1_34, %c0_35, %c1_36] : memref<4x2x2xi32, #tpu.memory_space<smem>>
    %72 = vector.broadcast %71 : i32 to vector<4x16xi32>
    %73 = arith.select %70, %72, %68 : vector<4x16xi1>, vector<4x16xi32>
    %c1_i32_37 = arith.constant 1 : i32
    %74 = vector.broadcast %c1_i32_37 : i32 to vector<4x16xi32>
    %75 = arith.cmpi eq, %2, %74 : vector<4x16xi32>
    %c1_38 = arith.constant 1 : index
    %c1_39 = arith.constant 1 : index
    %c0_40 = arith.constant 0 : index
    %76 = memref.load %arg2[%c1_38, %c1_39, %c0_40] : memref<4x2x2xi32, #tpu.memory_space<smem>>
    %77 = vector.broadcast %76 : i32 to vector<4x16xi32>
    %78 = arith.select %75, %77, %73 : vector<4x16xi1>, vector<4x16xi32>
    %c3_i32_41 = arith.constant 3 : i32
    %79 = vector.broadcast %c3_i32_41 : i32 to vector<4x16xi32>
    %80 = arith.cmpi eq, %2, %79 : vector<4x16xi32>
    %c1_42 = arith.constant 1 : index
    %c1_43 = arith.constant 1 : index
    %c1_44 = arith.constant 1 : index
    %81 = memref.load %arg2[%c1_42, %c1_43, %c1_44] : memref<4x2x2xi32, #tpu.memory_space<smem>>
    %82 = vector.broadcast %81 : i32 to vector<4x16xi32>
    %83 = arith.select %80, %82, %78 : vector<4x16xi1>, vector<4x16xi32>
    %84 = arith.cmpi eq, %3, %83 : vector<4x16xi32>
    %85 = arith.extui %84 : vector<4x16xi1> to vector<4x16xi32>
    %86 = arith.sitofp %85 : vector<4x16xi32> to vector<4x16xf32>
    %cst_45 = arith.constant dense<0.000000e+00> : vector<4x32xf32>
    %87 = tpu.matmul %86, %62, %cst_45 {dimension_numbers = #tpu.dot_dimension_numbers<[1], [0], [0], [1], [0, 0, 1, 1], [], []>} : vector<4x16xf32>, vector<16x32xf32>, vector<4x32xf32> -> vector<4x32xf32>
    %88 = vector.extract_strided_slice %87 {offsets = [0, 0], sizes = [2, 32], strides = [1, 1]} : vector<4x32xf32> to vector<2x32xf32>
    %89 = vector.extract_strided_slice %87 {offsets = [2, 0], sizes = [2, 32], strides = [1, 1]} : vector<4x32xf32> to vector<2x32xf32>
    %90 = tpu.concatenate %88, %89 in 1 : vector<2x32xf32>, vector<2x32xf32> -> vector<2x64xf32>
    %c1_46 = arith.constant 1 : index
    %c0_47 = arith.constant 0 : index
    %c0_48 = arith.constant 0 : index
    %91 = vector.load %arg5[%c1_46, %c0_47, %c0_48] : memref<4x64x32xf32, #tpu.memory_space<vmem>>, vector<1x64x32xf32>
    %92 = vector.shape_cast %91 : vector<1x64x32xf32> to vector<64x32xf32>
    %cst_49 = arith.constant dense<0.000000e+00> : vector<2x32xf32>
    %93 = tpu.matmul %90, %92, %cst_49 {dimension_numbers = #tpu.dot_dimension_numbers<[1], [0], [0], [1], [0, 0, 1, 1], [], []>} : vector<2x64xf32>, vector<64x32xf32>, vector<2x32xf32> -> vector<2x32xf32>
    %c1_50 = arith.constant 1 : index
    %c0_51 = arith.constant 0 : index
    %c0_52 = arith.constant 0 : index
    %94 = vector.load %arg6[%c1_50, %c0_51, %c0_52] : memref<4x1x32xf32, #tpu.memory_space<vmem>>, vector<1x1x32xf32>
    %95 = vector.shape_cast %94 : vector<1x1x32xf32> to vector<1x32xf32>
    %96 = vector.broadcast %95 : vector<1x32xf32> to vector<2x32xf32>
    %97 = arith.addf %93, %96 : vector<2x32xf32>
    %cst_53 = arith.constant 0.000000e+00 : f32
    %98 = vector.broadcast %cst_53 : f32 to vector<2x32xf32>
    %99 = arith.maximumf %97, %98 : vector<2x32xf32>
    %c1_54 = arith.constant 1 : index
    %c0_55 = arith.constant 0 : index
    %c0_56 = arith.constant 0 : index
    %100 = vector.load %arg7[%c1_54, %c0_55, %c0_56] : memref<4x2x1xf32, #tpu.memory_space<vmem>>, vector<1x2x1xf32>
    %101 = vector.shape_cast %100 : vector<1x2x1xf32> to vector<2x1xf32>
    %102 = vector.broadcast %101 : vector<2x1xf32> to vector<2x32xf32>
    %103 = arith.addf %99, %102 : vector<2x32xf32>
    %c1_57 = arith.constant 1 : index
    %c0_58 = arith.constant 0 : index
    %104 = memref.load %arg1[%c1_57, %c0_58] : memref<4x2xi32, #tpu.memory_space<smem>>
    %105 = vector.broadcast %104 : i32 to vector<16x1xi32>
    %106 = arith.cmpi eq, %1, %105 : vector<16x1xi32>
    %107 = vector.extract_strided_slice %103 {offsets = [0, 0], sizes = [1, 32], strides = [1, 1]} : vector<2x32xf32> to vector<1x32xf32>
    %108 = vector.shape_cast %106 : vector<16x1xi1> to vector<16x1xi1>
    %109 = vector.broadcast %108 : vector<16x1xi1> to vector<16x32xi1>
    %110 = vector.shape_cast %107 : vector<1x32xf32> to vector<1x32xf32>
    %111 = vector.broadcast %110 : vector<1x32xf32> to vector<16x32xf32>
    %112 = arith.select %109, %111, %62 : vector<16x32xi1>, vector<16x32xf32>
    %c1_59 = arith.constant 1 : index
    %c1_60 = arith.constant 1 : index
    %113 = memref.load %arg1[%c1_59, %c1_60] : memref<4x2xi32, #tpu.memory_space<smem>>
    %114 = vector.broadcast %113 : i32 to vector<16x1xi32>
    %115 = arith.cmpi eq, %1, %114 : vector<16x1xi32>
    %116 = vector.extract_strided_slice %103 {offsets = [1, 0], sizes = [1, 32], strides = [1, 1]} : vector<2x32xf32> to vector<1x32xf32>
    %117 = vector.shape_cast %115 : vector<16x1xi1> to vector<16x1xi1>
    %118 = vector.broadcast %117 : vector<16x1xi1> to vector<16x32xi1>
    %119 = vector.shape_cast %116 : vector<1x32xf32> to vector<1x32xf32>
    %120 = vector.broadcast %119 : vector<1x32xf32> to vector<16x32xf32>
    %121 = arith.select %118, %120, %112 : vector<16x32xi1>, vector<16x32xf32>
    %c0_i32_61 = arith.constant 0 : i32
    %122 = vector.broadcast %c0_i32_61 : i32 to vector<4x16xi32>
    %c0_i32_62 = arith.constant 0 : i32
    %123 = vector.broadcast %c0_i32_62 : i32 to vector<4x16xi32>
    %124 = arith.cmpi eq, %2, %123 : vector<4x16xi32>
    %c2 = arith.constant 2 : index
    %c0_63 = arith.constant 0 : index
    %c0_64 = arith.constant 0 : index
    %125 = memref.load %arg2[%c2, %c0_63, %c0_64] : memref<4x2x2xi32, #tpu.memory_space<smem>>
    %126 = vector.broadcast %125 : i32 to vector<4x16xi32>
    %127 = arith.select %124, %126, %122 : vector<4x16xi1>, vector<4x16xi32>
    %c2_i32_65 = arith.constant 2 : i32
    %128 = vector.broadcast %c2_i32_65 : i32 to vector<4x16xi32>
    %129 = arith.cmpi eq, %2, %128 : vector<4x16xi32>
    %c2_66 = arith.constant 2 : index
    %c0_67 = arith.constant 0 : index
    %c1_68 = arith.constant 1 : index
    %130 = memref.load %arg2[%c2_66, %c0_67, %c1_68] : memref<4x2x2xi32, #tpu.memory_space<smem>>
    %131 = vector.broadcast %130 : i32 to vector<4x16xi32>
    %132 = arith.select %129, %131, %127 : vector<4x16xi1>, vector<4x16xi32>
    %c1_i32_69 = arith.constant 1 : i32
    %133 = vector.broadcast %c1_i32_69 : i32 to vector<4x16xi32>
    %134 = arith.cmpi eq, %2, %133 : vector<4x16xi32>
    %c2_70 = arith.constant 2 : index
    %c1_71 = arith.constant 1 : index
    %c0_72 = arith.constant 0 : index
    %135 = memref.load %arg2[%c2_70, %c1_71, %c0_72] : memref<4x2x2xi32, #tpu.memory_space<smem>>
    %136 = vector.broadcast %135 : i32 to vector<4x16xi32>
    %137 = arith.select %134, %136, %132 : vector<4x16xi1>, vector<4x16xi32>
    %c3_i32_73 = arith.constant 3 : i32
    %138 = vector.broadcast %c3_i32_73 : i32 to vector<4x16xi32>
    %139 = arith.cmpi eq, %2, %138 : vector<4x16xi32>
    %c2_74 = arith.constant 2 : index
    %c1_75 = arith.constant 1 : index
    %c1_76 = arith.constant 1 : index
    %140 = memref.load %arg2[%c2_74, %c1_75, %c1_76] : memref<4x2x2xi32, #tpu.memory_space<smem>>
    %141 = vector.broadcast %140 : i32 to vector<4x16xi32>
    %142 = arith.select %139, %141, %137 : vector<4x16xi1>, vector<4x16xi32>
    %143 = arith.cmpi eq, %3, %142 : vector<4x16xi32>
    %144 = arith.extui %143 : vector<4x16xi1> to vector<4x16xi32>
    %145 = arith.sitofp %144 : vector<4x16xi32> to vector<4x16xf32>
    %cst_77 = arith.constant dense<0.000000e+00> : vector<4x32xf32>
    %146 = tpu.matmul %145, %121, %cst_77 {dimension_numbers = #tpu.dot_dimension_numbers<[1], [0], [0], [1], [0, 0, 1, 1], [], []>} : vector<4x16xf32>, vector<16x32xf32>, vector<4x32xf32> -> vector<4x32xf32>
    %147 = vector.extract_strided_slice %146 {offsets = [0, 0], sizes = [2, 32], strides = [1, 1]} : vector<4x32xf32> to vector<2x32xf32>
    %148 = vector.extract_strided_slice %146 {offsets = [2, 0], sizes = [2, 32], strides = [1, 1]} : vector<4x32xf32> to vector<2x32xf32>
    %149 = tpu.concatenate %147, %148 in 1 : vector<2x32xf32>, vector<2x32xf32> -> vector<2x64xf32>
    %c2_78 = arith.constant 2 : index
    %c0_79 = arith.constant 0 : index
    %c0_80 = arith.constant 0 : index
    %150 = vector.load %arg5[%c2_78, %c0_79, %c0_80] : memref<4x64x32xf32, #tpu.memory_space<vmem>>, vector<1x64x32xf32>
    %151 = vector.shape_cast %150 : vector<1x64x32xf32> to vector<64x32xf32>
    %cst_81 = arith.constant dense<0.000000e+00> : vector<2x32xf32>
    %152 = tpu.matmul %149, %151, %cst_81 {dimension_numbers = #tpu.dot_dimension_numbers<[1], [0], [0], [1], [0, 0, 1, 1], [], []>} : vector<2x64xf32>, vector<64x32xf32>, vector<2x32xf32> -> vector<2x32xf32>
    %c2_82 = arith.constant 2 : index
    %c0_83 = arith.constant 0 : index
    %c0_84 = arith.constant 0 : index
    %153 = vector.load %arg6[%c2_82, %c0_83, %c0_84] : memref<4x1x32xf32, #tpu.memory_space<vmem>>, vector<1x1x32xf32>
    %154 = vector.shape_cast %153 : vector<1x1x32xf32> to vector<1x32xf32>
    %155 = vector.broadcast %154 : vector<1x32xf32> to vector<2x32xf32>
    %156 = arith.addf %152, %155 : vector<2x32xf32>
    %cst_85 = arith.constant 0.000000e+00 : f32
    %157 = vector.broadcast %cst_85 : f32 to vector<2x32xf32>
    %158 = arith.maximumf %156, %157 : vector<2x32xf32>
    %c2_86 = arith.constant 2 : index
    %c0_87 = arith.constant 0 : index
    %c0_88 = arith.constant 0 : index
    %159 = vector.load %arg7[%c2_86, %c0_87, %c0_88] : memref<4x2x1xf32, #tpu.memory_space<vmem>>, vector<1x2x1xf32>
    %160 = vector.shape_cast %159 : vector<1x2x1xf32> to vector<2x1xf32>
    %161 = vector.broadcast %160 : vector<2x1xf32> to vector<2x32xf32>
    %162 = arith.addf %158, %161 : vector<2x32xf32>
    %c2_89 = arith.constant 2 : index
    %c0_90 = arith.constant 0 : index
    %163 = memref.load %arg1[%c2_89, %c0_90] : memref<4x2xi32, #tpu.memory_space<smem>>
    %164 = vector.broadcast %163 : i32 to vector<16x1xi32>
    %165 = arith.cmpi eq, %1, %164 : vector<16x1xi32>
    %166 = vector.extract_strided_slice %162 {offsets = [0, 0], sizes = [1, 32], strides = [1, 1]} : vector<2x32xf32> to vector<1x32xf32>
    %167 = vector.shape_cast %165 : vector<16x1xi1> to vector<16x1xi1>
    %168 = vector.broadcast %167 : vector<16x1xi1> to vector<16x32xi1>
    %169 = vector.shape_cast %166 : vector<1x32xf32> to vector<1x32xf32>
    %170 = vector.broadcast %169 : vector<1x32xf32> to vector<16x32xf32>
    %171 = arith.select %168, %170, %121 : vector<16x32xi1>, vector<16x32xf32>
    %c2_91 = arith.constant 2 : index
    %c1_92 = arith.constant 1 : index
    %172 = memref.load %arg1[%c2_91, %c1_92] : memref<4x2xi32, #tpu.memory_space<smem>>
    %173 = vector.broadcast %172 : i32 to vector<16x1xi32>
    %174 = arith.cmpi eq, %1, %173 : vector<16x1xi32>
    %175 = vector.extract_strided_slice %162 {offsets = [1, 0], sizes = [1, 32], strides = [1, 1]} : vector<2x32xf32> to vector<1x32xf32>
    %176 = vector.shape_cast %174 : vector<16x1xi1> to vector<16x1xi1>
    %177 = vector.broadcast %176 : vector<16x1xi1> to vector<16x32xi1>
    %178 = vector.shape_cast %175 : vector<1x32xf32> to vector<1x32xf32>
    %179 = vector.broadcast %178 : vector<1x32xf32> to vector<16x32xf32>
    %180 = arith.select %177, %179, %171 : vector<16x32xi1>, vector<16x32xf32>
    %c0_i32_93 = arith.constant 0 : i32
    %181 = vector.broadcast %c0_i32_93 : i32 to vector<4x16xi32>
    %c0_i32_94 = arith.constant 0 : i32
    %182 = vector.broadcast %c0_i32_94 : i32 to vector<4x16xi32>
    %183 = arith.cmpi eq, %2, %182 : vector<4x16xi32>
    %c3 = arith.constant 3 : index
    %c0_95 = arith.constant 0 : index
    %c0_96 = arith.constant 0 : index
    %184 = memref.load %arg2[%c3, %c0_95, %c0_96] : memref<4x2x2xi32, #tpu.memory_space<smem>>
    %185 = vector.broadcast %184 : i32 to vector<4x16xi32>
    %186 = arith.select %183, %185, %181 : vector<4x16xi1>, vector<4x16xi32>
    %c2_i32_97 = arith.constant 2 : i32
    %187 = vector.broadcast %c2_i32_97 : i32 to vector<4x16xi32>
    %188 = arith.cmpi eq, %2, %187 : vector<4x16xi32>
    %c3_98 = arith.constant 3 : index
    %c0_99 = arith.constant 0 : index
    %c1_100 = arith.constant 1 : index
    %189 = memref.load %arg2[%c3_98, %c0_99, %c1_100] : memref<4x2x2xi32, #tpu.memory_space<smem>>
    %190 = vector.broadcast %189 : i32 to vector<4x16xi32>
    %191 = arith.select %188, %190, %186 : vector<4x16xi1>, vector<4x16xi32>
    %c1_i32_101 = arith.constant 1 : i32
    %192 = vector.broadcast %c1_i32_101 : i32 to vector<4x16xi32>
    %193 = arith.cmpi eq, %2, %192 : vector<4x16xi32>
    %c3_102 = arith.constant 3 : index
    %c1_103 = arith.constant 1 : index
    %c0_104 = arith.constant 0 : index
    %194 = memref.load %arg2[%c3_102, %c1_103, %c0_104] : memref<4x2x2xi32, #tpu.memory_space<smem>>
    %195 = vector.broadcast %194 : i32 to vector<4x16xi32>
    %196 = arith.select %193, %195, %191 : vector<4x16xi1>, vector<4x16xi32>
    %c3_i32_105 = arith.constant 3 : i32
    %197 = vector.broadcast %c3_i32_105 : i32 to vector<4x16xi32>
    %198 = arith.cmpi eq, %2, %197 : vector<4x16xi32>
    %c3_106 = arith.constant 3 : index
    %c1_107 = arith.constant 1 : index
    %c1_108 = arith.constant 1 : index
    %199 = memref.load %arg2[%c3_106, %c1_107, %c1_108] : memref<4x2x2xi32, #tpu.memory_space<smem>>
    %200 = vector.broadcast %199 : i32 to vector<4x16xi32>
    %201 = arith.select %198, %200, %196 : vector<4x16xi1>, vector<4x16xi32>
    %202 = arith.cmpi eq, %3, %201 : vector<4x16xi32>
    %203 = arith.extui %202 : vector<4x16xi1> to vector<4x16xi32>
    %204 = arith.sitofp %203 : vector<4x16xi32> to vector<4x16xf32>
    %cst_109 = arith.constant dense<0.000000e+00> : vector<4x32xf32>
    %205 = tpu.matmul %204, %180, %cst_109 {dimension_numbers = #tpu.dot_dimension_numbers<[1], [0], [0], [1], [0, 0, 1, 1], [], []>} : vector<4x16xf32>, vector<16x32xf32>, vector<4x32xf32> -> vector<4x32xf32>
    %206 = vector.extract_strided_slice %205 {offsets = [0, 0], sizes = [2, 32], strides = [1, 1]} : vector<4x32xf32> to vector<2x32xf32>
    %207 = vector.extract_strided_slice %205 {offsets = [2, 0], sizes = [2, 32], strides = [1, 1]} : vector<4x32xf32> to vector<2x32xf32>
    %208 = tpu.concatenate %206, %207 in 1 : vector<2x32xf32>, vector<2x32xf32> -> vector<2x64xf32>
    %c3_110 = arith.constant 3 : index
    %c0_111 = arith.constant 0 : index
    %c0_112 = arith.constant 0 : index
    %209 = vector.load %arg5[%c3_110, %c0_111, %c0_112] : memref<4x64x32xf32, #tpu.memory_space<vmem>>, vector<1x64x32xf32>
    %210 = vector.shape_cast %209 : vector<1x64x32xf32> to vector<64x32xf32>
    %cst_113 = arith.constant dense<0.000000e+00> : vector<2x32xf32>
    %211 = tpu.matmul %208, %210, %cst_113 {dimension_numbers = #tpu.dot_dimension_numbers<[1], [0], [0], [1], [0, 0, 1, 1], [], []>} : vector<2x64xf32>, vector<64x32xf32>, vector<2x32xf32> -> vector<2x32xf32>
    %c3_114 = arith.constant 3 : index
    %c0_115 = arith.constant 0 : index
    %c0_116 = arith.constant 0 : index
    %212 = vector.load %arg6[%c3_114, %c0_115, %c0_116] : memref<4x1x32xf32, #tpu.memory_space<vmem>>, vector<1x1x32xf32>
    %213 = vector.shape_cast %212 : vector<1x1x32xf32> to vector<1x32xf32>
    %214 = vector.broadcast %213 : vector<1x32xf32> to vector<2x32xf32>
    %215 = arith.addf %211, %214 : vector<2x32xf32>
    %cst_117 = arith.constant 0.000000e+00 : f32
    %216 = vector.broadcast %cst_117 : f32 to vector<2x32xf32>
    %217 = arith.maximumf %215, %216 : vector<2x32xf32>
    %c3_118 = arith.constant 3 : index
    %c0_119 = arith.constant 0 : index
    %c0_120 = arith.constant 0 : index
    %218 = vector.load %arg7[%c3_118, %c0_119, %c0_120] : memref<4x2x1xf32, #tpu.memory_space<vmem>>, vector<1x2x1xf32>
    %219 = vector.shape_cast %218 : vector<1x2x1xf32> to vector<2x1xf32>
    %220 = vector.broadcast %219 : vector<2x1xf32> to vector<2x32xf32>
    %221 = arith.addf %217, %220 : vector<2x32xf32>
    %c3_121 = arith.constant 3 : index
    %c0_122 = arith.constant 0 : index
    %222 = memref.load %arg1[%c3_121, %c0_122] : memref<4x2xi32, #tpu.memory_space<smem>>
    %223 = vector.broadcast %222 : i32 to vector<16x1xi32>
    %224 = arith.cmpi eq, %1, %223 : vector<16x1xi32>
    %225 = vector.extract_strided_slice %221 {offsets = [0, 0], sizes = [1, 32], strides = [1, 1]} : vector<2x32xf32> to vector<1x32xf32>
    %226 = vector.shape_cast %224 : vector<16x1xi1> to vector<16x1xi1>
    %227 = vector.broadcast %226 : vector<16x1xi1> to vector<16x32xi1>
    %228 = vector.shape_cast %225 : vector<1x32xf32> to vector<1x32xf32>
    %229 = vector.broadcast %228 : vector<1x32xf32> to vector<16x32xf32>
    %230 = arith.select %227, %229, %180 : vector<16x32xi1>, vector<16x32xf32>
    %c3_123 = arith.constant 3 : index
    %c1_124 = arith.constant 1 : index
    %231 = memref.load %arg1[%c3_123, %c1_124] : memref<4x2xi32, #tpu.memory_space<smem>>
    %232 = vector.broadcast %231 : i32 to vector<16x1xi32>
    %233 = arith.cmpi eq, %1, %232 : vector<16x1xi32>
    %234 = vector.extract_strided_slice %221 {offsets = [1, 0], sizes = [1, 32], strides = [1, 1]} : vector<2x32xf32> to vector<1x32xf32>
    %235 = vector.shape_cast %233 : vector<16x1xi1> to vector<16x1xi1>
    %236 = vector.broadcast %235 : vector<16x1xi1> to vector<16x32xi1>
    %237 = vector.shape_cast %234 : vector<1x32xf32> to vector<1x32xf32>
    %238 = vector.broadcast %237 : vector<1x32xf32> to vector<16x32xf32>
    %239 = arith.select %236, %238, %230 : vector<16x32xi1>, vector<16x32xf32>
    %240 = tpu.iota {dimensions = array<i32: 0>} : vector<8x16xi32>
    %241 = tpu.iota {dimensions = array<i32: 1>} : vector<8x16xi32>
    %c0_i32_125 = arith.constant 0 : i32
    %242 = vector.broadcast %c0_i32_125 : i32 to vector<8x16xi32>
    %c0_i32_126 = arith.constant 0 : i32
    %243 = vector.broadcast %c0_i32_126 : i32 to vector<8x16xi32>
    %244 = arith.cmpi eq, %240, %243 : vector<8x16xi32>
    %c0_127 = arith.constant 0 : index
    %245 = memref.load %arg3[%c0_127] : memref<8xi32, #tpu.memory_space<smem>>
    %246 = vector.broadcast %245 : i32 to vector<8x16xi32>
    %247 = arith.select %244, %246, %242 : vector<8x16xi1>, vector<8x16xi32>
    %c1_i32_128 = arith.constant 1 : i32
    %248 = vector.broadcast %c1_i32_128 : i32 to vector<8x16xi32>
    %249 = arith.cmpi eq, %240, %248 : vector<8x16xi32>
    %c1_129 = arith.constant 1 : index
    %250 = memref.load %arg3[%c1_129] : memref<8xi32, #tpu.memory_space<smem>>
    %251 = vector.broadcast %250 : i32 to vector<8x16xi32>
    %252 = arith.select %249, %251, %247 : vector<8x16xi1>, vector<8x16xi32>
    %c2_i32_130 = arith.constant 2 : i32
    %253 = vector.broadcast %c2_i32_130 : i32 to vector<8x16xi32>
    %254 = arith.cmpi eq, %240, %253 : vector<8x16xi32>
    %c2_131 = arith.constant 2 : index
    %255 = memref.load %arg3[%c2_131] : memref<8xi32, #tpu.memory_space<smem>>
    %256 = vector.broadcast %255 : i32 to vector<8x16xi32>
    %257 = arith.select %254, %256, %252 : vector<8x16xi1>, vector<8x16xi32>
    %c3_i32_132 = arith.constant 3 : i32
    %258 = vector.broadcast %c3_i32_132 : i32 to vector<8x16xi32>
    %259 = arith.cmpi eq, %240, %258 : vector<8x16xi32>
    %c3_133 = arith.constant 3 : index
    %260 = memref.load %arg3[%c3_133] : memref<8xi32, #tpu.memory_space<smem>>
    %261 = vector.broadcast %260 : i32 to vector<8x16xi32>
    %262 = arith.select %259, %261, %257 : vector<8x16xi1>, vector<8x16xi32>
    %c4_i32 = arith.constant 4 : i32
    %263 = vector.broadcast %c4_i32 : i32 to vector<8x16xi32>
    %264 = arith.cmpi eq, %240, %263 : vector<8x16xi32>
    %c4 = arith.constant 4 : index
    %265 = memref.load %arg3[%c4] : memref<8xi32, #tpu.memory_space<smem>>
    %266 = vector.broadcast %265 : i32 to vector<8x16xi32>
    %267 = arith.select %264, %266, %262 : vector<8x16xi1>, vector<8x16xi32>
    %c5_i32 = arith.constant 5 : i32
    %268 = vector.broadcast %c5_i32 : i32 to vector<8x16xi32>
    %269 = arith.cmpi eq, %240, %268 : vector<8x16xi32>
    %c5 = arith.constant 5 : index
    %270 = memref.load %arg3[%c5] : memref<8xi32, #tpu.memory_space<smem>>
    %271 = vector.broadcast %270 : i32 to vector<8x16xi32>
    %272 = arith.select %269, %271, %267 : vector<8x16xi1>, vector<8x16xi32>
    %c6_i32 = arith.constant 6 : i32
    %273 = vector.broadcast %c6_i32 : i32 to vector<8x16xi32>
    %274 = arith.cmpi eq, %240, %273 : vector<8x16xi32>
    %c6 = arith.constant 6 : index
    %275 = memref.load %arg3[%c6] : memref<8xi32, #tpu.memory_space<smem>>
    %276 = vector.broadcast %275 : i32 to vector<8x16xi32>
    %277 = arith.select %274, %276, %272 : vector<8x16xi1>, vector<8x16xi32>
    %c7_i32 = arith.constant 7 : i32
    %278 = vector.broadcast %c7_i32 : i32 to vector<8x16xi32>
    %279 = arith.cmpi eq, %240, %278 : vector<8x16xi32>
    %c7 = arith.constant 7 : index
    %280 = memref.load %arg3[%c7] : memref<8xi32, #tpu.memory_space<smem>>
    %281 = vector.broadcast %280 : i32 to vector<8x16xi32>
    %282 = arith.select %279, %281, %277 : vector<8x16xi1>, vector<8x16xi32>
    %283 = arith.cmpi eq, %241, %282 : vector<8x16xi32>
    %284 = arith.extui %283 : vector<8x16xi1> to vector<8x16xi32>
    %285 = arith.sitofp %284 : vector<8x16xi32> to vector<8x16xf32>
    %cst_134 = arith.constant dense<0.000000e+00> : vector<8x32xf32>
    %286 = tpu.matmul %285, %239, %cst_134 {dimension_numbers = #tpu.dot_dimension_numbers<[1], [0], [0], [1], [0, 0, 1, 1], [], []>} : vector<8x16xf32>, vector<16x32xf32>, vector<8x32xf32> -> vector<8x32xf32>
    %c0_135 = arith.constant 0 : index
    %c0_136 = arith.constant 0 : index
    %287 = vector.load %arg8[%c0_135, %c0_136] : memref<32x1xf32, #tpu.memory_space<vmem>>, vector<32x1xf32>
    %cst_137 = arith.constant dense<0.000000e+00> : vector<8x1xf32>
    %288 = tpu.matmul %286, %287, %cst_137 {dimension_numbers = #tpu.dot_dimension_numbers<[1], [0], [0], [1], [0, 0, 1, 1], [], []>} : vector<8x32xf32>, vector<32x1xf32>, vector<8x1xf32> -> vector<8x1xf32>
    %c0_138 = arith.constant 0 : index
    %c0_139 = arith.constant 0 : index
    %289 = vector.load %arg9[%c0_138, %c0_139] : memref<1x1xf32, #tpu.memory_space<vmem>>, vector<1x1xf32>
    %290 = vector.broadcast %289 : vector<1x1xf32> to vector<8x1xf32>
    %291 = arith.addf %288, %290 : vector<8x1xf32>
    %c0_140 = arith.constant 0 : index
    %c0_141 = arith.constant 0 : index
    %292 = vector.load %arg10[%c0_140, %c0_141] : memref<8x1xf32, #tpu.memory_space<vmem>>, vector<8x1xf32>
    %c0_142 = arith.constant 0 : index
    %c0_143 = arith.constant 0 : index
    %293 = vector.load %arg11[%c0_142, %c0_143] : memref<8x1xf32, #tpu.memory_space<vmem>>, vector<8x1xf32>
    %c0_144 = arith.constant 0 : index
    %c0_145 = arith.constant 0 : index
    %294 = vector.load %arg12[%c0_144, %c0_145] : memref<8x1xf32, #tpu.memory_space<vmem>>, vector<8x1xf32>
    %c0_146 = arith.constant 0 : index
    %c0_147 = arith.constant 0 : index
    %295 = vector.load %arg13[%c0_146, %c0_147] : memref<1x1xf32, #tpu.memory_space<vmem>>, vector<1x1xf32>
    %cst_148 = arith.constant 0.000000e+00 : f32
    %296 = vector.broadcast %cst_148 : f32 to vector<8x1xf32>
    %297 = arith.cmpf oge, %291, %296 : vector<8x1xf32>
    %298 = arith.extui %297 : vector<8x1xi1> to vector<8x1xi32>
    %299 = arith.sitofp %298 : vector<8x1xi32> to vector<8x1xf32>
    %300 = arith.mulf %292, %299 : vector<8x1xf32>
    %301 = vector.shape_cast %300 : vector<8x1xf32> to vector<1x8x1xf32>
    %cst_149 = arith.constant dense<0.000000e+00> : vector<1xf32>
    %302 = vector.multi_reduction <add>, %301, %cst_149 [1, 2] : vector<1x8x1xf32> to vector<1xf32>
    %303 = vector.shape_cast %302 : vector<1xf32> to vector<1x1x1xf32>
    %304 = vector.extract %303[0, 0, 0] : f32 from vector<1x1x1xf32>
    %305 = vector.broadcast %304 : f32 to vector<1x1xf32>
    %cst_150 = arith.constant 0.000000e+00 : f32
    %306 = vector.broadcast %cst_150 : f32 to vector<8x1xf32>
    %307 = arith.cmpf olt, %291, %306 : vector<8x1xf32>
    %308 = arith.extui %307 : vector<8x1xi1> to vector<8x1xi32>
    %309 = arith.sitofp %308 : vector<8x1xi32> to vector<8x1xf32>
    %310 = arith.mulf %293, %309 : vector<8x1xf32>
    %311 = vector.shape_cast %310 : vector<8x1xf32> to vector<1x8x1xf32>
    %cst_151 = arith.constant dense<0.000000e+00> : vector<1xf32>
    %312 = vector.multi_reduction <add>, %311, %cst_151 [1, 2] : vector<1x8x1xf32> to vector<1xf32>
    %313 = vector.shape_cast %312 : vector<1xf32> to vector<1x1x1xf32>
    %314 = vector.extract %313[0, 0, 0] : f32 from vector<1x1x1xf32>
    %315 = vector.broadcast %314 : f32 to vector<1x1xf32>
    %316 = vector.broadcast %295 : vector<1x1xf32> to vector<8x1xf32>
    %317 = arith.mulf %316, %294 : vector<8x1xf32>
    %cst_152 = arith.constant 0.000000e+00 : f32
    %318 = vector.broadcast %cst_152 : f32 to vector<8x1xf32>
    %319 = arith.subf %318, %291 : vector<8x1xf32>
    %cst_153 = arith.constant 0.000000e+00 : f32
    %320 = vector.broadcast %cst_153 : f32 to vector<8x1xf32>
    %321 = arith.maximumf %319, %320 : vector<8x1xf32>
    %322 = math.absf %319 : vector<8x1xf32>
    %cst_154 = arith.constant 0.000000e+00 : f32
    %323 = vector.broadcast %cst_154 : f32 to vector<8x1xf32>
    %324 = arith.subf %323, %322 : vector<8x1xf32>
    %325 = math.exp %324 : vector<8x1xf32>
    %cst_155 = arith.constant 1.000000e+00 : f32
    %326 = vector.broadcast %cst_155 : f32 to vector<8x1xf32>
    %327 = arith.addf %326, %325 : vector<8x1xf32>
    %328 = math.log %327 : vector<8x1xf32>
    %329 = arith.addf %321, %328 : vector<8x1xf32>
    %330 = arith.mulf %317, %329 : vector<8x1xf32>
    %cst_156 = arith.constant 1.000000e+00 : f32
    %331 = vector.broadcast %cst_156 : f32 to vector<8x1xf32>
    %332 = arith.subf %331, %294 : vector<8x1xf32>
    %cst_157 = arith.constant 0.000000e+00 : f32
    %333 = vector.broadcast %cst_157 : f32 to vector<8x1xf32>
    %334 = arith.maximumf %291, %333 : vector<8x1xf32>
    %335 = math.absf %291 : vector<8x1xf32>
    %cst_158 = arith.constant 0.000000e+00 : f32
    %336 = vector.broadcast %cst_158 : f32 to vector<8x1xf32>
    %337 = arith.subf %336, %335 : vector<8x1xf32>
    %338 = math.exp %337 : vector<8x1xf32>
    %cst_159 = arith.constant 1.000000e+00 : f32
    %339 = vector.broadcast %cst_159 : f32 to vector<8x1xf32>
    %340 = arith.addf %339, %338 : vector<8x1xf32>
    %341 = math.log %340 : vector<8x1xf32>
    %342 = arith.addf %334, %341 : vector<8x1xf32>
    %343 = arith.mulf %332, %342 : vector<8x1xf32>
    %344 = arith.addf %330, %343 : vector<8x1xf32>
    %345 = arith.addf %292, %293 : vector<8x1xf32>
    %346 = arith.mulf %345, %344 : vector<8x1xf32>
    %347 = vector.shape_cast %346 : vector<8x1xf32> to vector<1x8x1xf32>
    %cst_160 = arith.constant dense<0.000000e+00> : vector<1xf32>
    %348 = vector.multi_reduction <add>, %347, %cst_160 [1, 2] : vector<1x8x1xf32> to vector<1xf32>
    %349 = vector.shape_cast %348 : vector<1xf32> to vector<1x1x1xf32>
    %350 = vector.extract %349[0, 0, 0] : f32 from vector<1x1x1xf32>
    %351 = vector.broadcast %350 : f32 to vector<1x1xf32>
    %352 = tpu.iota {dimensions = array<i32: 1>} : vector<1x8xi32>
    %c0_i32_161 = arith.constant 0 : i32
    %353 = vector.broadcast %c0_i32_161 : i32 to vector<1x8xi32>
    %354 = arith.cmpi eq, %352, %353 : vector<1x8xi32>
    %c1_i32_162 = arith.constant 1 : i32
    %355 = vector.broadcast %c1_i32_162 : i32 to vector<1x8xi32>
    %356 = arith.cmpi eq, %352, %355 : vector<1x8xi32>
    %c2_i32_163 = arith.constant 2 : i32
    %357 = vector.broadcast %c2_i32_163 : i32 to vector<1x8xi32>
    %358 = arith.cmpi eq, %352, %357 : vector<1x8xi32>
    %cst_164 = arith.constant 0.000000e+00 : f32
    %359 = vector.broadcast %cst_164 : f32 to vector<1x1xf32>
    %360 = vector.shape_cast %315 : vector<1x1xf32> to vector<1x1xf32>
    %361 = vector.broadcast %360 : vector<1x1xf32> to vector<1x8xf32>
    %362 = vector.shape_cast %359 : vector<1x1xf32> to vector<1x1xf32>
    %363 = vector.broadcast %362 : vector<1x1xf32> to vector<1x8xf32>
    %364 = arith.select %358, %361, %363 : vector<1x8xi1>, vector<1x8xf32>
    %365 = vector.shape_cast %305 : vector<1x1xf32> to vector<1x1xf32>
    %366 = vector.broadcast %365 : vector<1x1xf32> to vector<1x8xf32>
    %367 = arith.select %356, %366, %364 : vector<1x8xi1>, vector<1x8xf32>
    %368 = vector.shape_cast %351 : vector<1x1xf32> to vector<1x1xf32>
    %369 = vector.broadcast %368 : vector<1x1xf32> to vector<1x8xf32>
    %370 = arith.select %354, %369, %367 : vector<1x8xi1>, vector<1x8xf32>
    %c0_165 = arith.constant 0 : index
    %c0_166 = arith.constant 0 : index
    %371 = vector.load %arg14[%c0_165, %c0_166] : memref<1x8xf32, #tpu.memory_space<vmem>>, vector<1x8xf32>
    tpu.vector_store %arg14[%c0_165, %c0_166], %370 {strides = array<i32>} : memref<1x8xf32, #tpu.memory_space<vmem>>, vector<1x8xf32>,
    return
  }
  func.func @transform_0(%arg0: i32, %arg1: memref<4x2xi32, #tpu.memory_space<smem>>, %arg2: memref<4x2x2xi32, #tpu.memory_space<smem>>, %arg3: memref<8xi32, #tpu.memory_space<smem>>) -> (i32, i32) {
    %c0_i32 = arith.constant 0 : i32
    %c0_i32_0 = arith.constant 0 : i32
    %c0_i32_1 = arith.constant 0 : i32
    return %c0_i32, %c0_i32_0 : i32, i32
  }
  func.func @transform_1(%arg0: i32, %arg1: memref<4x2xi32, #tpu.memory_space<smem>>, %arg2: memref<4x2x2xi32, #tpu.memory_space<smem>>, %arg3: memref<8xi32, #tpu.memory_space<smem>>) -> (i32, i32, i32) {
    %c0_i32 = arith.constant 0 : i32
    %c0_i32_0 = arith.constant 0 : i32
    %c0_i32_1 = arith.constant 0 : i32
    %c0_i32_2 = arith.constant 0 : i32
    return %c0_i32, %c0_i32_0, %c0_i32_1 : i32, i32, i32
  }
  func.func @transform_2(%arg0: i32, %arg1: memref<4x2xi32, #tpu.memory_space<smem>>, %arg2: memref<4x2x2xi32, #tpu.memory_space<smem>>, %arg3: memref<8xi32, #tpu.memory_space<smem>>) -> (i32, i32, i32) {
    %c0_i32 = arith.constant 0 : i32
    %c0_i32_0 = arith.constant 0 : i32
    %c0_i32_1 = arith.constant 0 : i32
    %c0_i32_2 = arith.constant 0 : i32
    return %c0_i32, %c0_i32_0, %c0_i32_1 : i32, i32, i32
  }
  func.func @transform_3(%arg0: i32, %arg1: memref<4x2xi32, #tpu.memory_space<smem>>, %arg2: memref<4x2x2xi32, #tpu.memory_space<smem>>, %arg3: memref<8xi32, #tpu.memory_space<smem>>) -> (i32, i32, i32) {
    %c0_i32 = arith.constant 0 : i32
    %c0_i32_0 = arith.constant 0 : i32
    %c0_i32_1 = arith.constant 0 : i32
    %c0_i32_2 = arith.constant 0 : i32
    return %c0_i32, %c0_i32_0, %c0_i32_1 : i32, i32, i32
  }
  func.func @transform_4(%arg0: i32, %arg1: memref<4x2xi32, #tpu.memory_space<smem>>, %arg2: memref<4x2x2xi32, #tpu.memory_space<smem>>, %arg3: memref<8xi32, #tpu.memory_space<smem>>) -> (i32, i32) {
    %c0_i32 = arith.constant 0 : i32
    %c0_i32_0 = arith.constant 0 : i32
    %c0_i32_1 = arith.constant 0 : i32
    return %c0_i32, %c0_i32_0 : i32, i32
  }
  func.func @transform_5(%arg0: i32, %arg1: memref<4x2xi32, #tpu.memory_space<smem>>, %arg2: memref<4x2x2xi32, #tpu.memory_space<smem>>, %arg3: memref<8xi32, #tpu.memory_space<smem>>) -> (i32, i32) {
    %c0_i32 = arith.constant 0 : i32
    %c0_i32_0 = arith.constant 0 : i32
    %c0_i32_1 = arith.constant 0 : i32
    return %c0_i32, %c0_i32_0 : i32, i32
  }
  func.func @transform_6(%arg0: i32, %arg1: memref<4x2xi32, #tpu.memory_space<smem>>, %arg2: memref<4x2x2xi32, #tpu.memory_space<smem>>, %arg3: memref<8xi32, #tpu.memory_space<smem>>) -> (i32, i32) {
    %c0_i32 = arith.constant 0 : i32
    %c0_i32_0 = arith.constant 0 : i32
    %c0_i32_1 = arith.constant 0 : i32
    return %c0_i32, %c0_i32_0 : i32, i32
  }
  func.func @transform_7(%arg0: i32, %arg1: memref<4x2xi32, #tpu.memory_space<smem>>, %arg2: memref<4x2x2xi32, #tpu.memory_space<smem>>, %arg3: memref<8xi32, #tpu.memory_space<smem>>) -> (i32, i32) {
    %c0_i32 = arith.constant 0 : i32
    %c0_i32_0 = arith.constant 0 : i32
    %c0_i32_1 = arith.constant 0 : i32
    return %c0_i32, %c0_i32_0 : i32, i32
  }
  func.func @transform_8(%arg0: i32, %arg1: memref<4x2xi32, #tpu.memory_space<smem>>, %arg2: memref<4x2x2xi32, #tpu.memory_space<smem>>, %arg3: memref<8xi32, #tpu.memory_space<smem>>) -> (i32, i32) {
    %c0_i32 = arith.constant 0 : i32
    %c0_i32_0 = arith.constant 0 : i32
    %c0_i32_1 = arith.constant 0 : i32
    return %c0_i32, %c0_i32_0 : i32, i32
  }
  func.func @transform_9(%arg0: i32, %arg1: memref<4x2xi32, #tpu.memory_space<smem>>, %arg2: memref<4x2x2xi32, #tpu.memory_space<smem>>, %arg3: memref<8xi32, #tpu.memory_space<smem>>) -> (i32, i32) {
    %c0_i32 = arith.constant 0 : i32
    %c0_i32_0 = arith.constant 0 : i32
    %c0_i32_1 = arith.constant 0 : i32
    return %c0_i32, %c0_i32_0 : i32, i32
  }
  func.func @transform_10(%arg0: i32, %arg1: memref<4x2xi32, #tpu.memory_space<smem>>, %arg2: memref<4x2x2xi32, #tpu.memory_space<smem>>, %arg3: memref<8xi32, #tpu.memory_space<smem>>) -> (i32, i32) {
    %c0_i32 = arith.constant 0 : i32
    %c0_i32_0 = arith.constant 0 : i32
    %c0_i32_1 = arith.constant 0 : i32
    return %c0_i32, %c0_i32_0 : i32, i32
  }
}

</mosaic_0001>

<llo_original>
// kernel: learning_model_forward.1
$region0: #{learning_model_forward.1}
  #allocation0 [shape = 'u32[]', space=smem, size = 0x4, offset = 0x4, fixed_abs, tag = 'smem constant byte address 0x4 - core index']
  #allocation1 [shape = 'u32[144,128]{1,0:T(1,128)}', space=vmem, size = 0x12000, scoped, tag = 'internal scratch']
  #allocation2 [shape = 's32[1]{0}', space=sflag, size = 0x4, scoped, tag = 'scoped memory for learning_model_forward.1']
  #allocation3 [shape = 'u8[2048]{0}', space=smem, size = 0x800, scoped, tag = 'prefetched SMEM operand 0']
  #allocation4 [shape = 'u8[4096]{0}', space=smem, size = 0x1000, scoped, tag = 'prefetched SMEM operand 1']
  #allocation5 [shape = 'u8[512]{0}', space=smem, size = 0x200, scoped, tag = 'prefetched SMEM operand 2']
  #allocation6 [shape = 'f32[1,1]{1,0:T(1,128)S(1)}', space=vmem, size = 0x200, scoped, tag = 'scoped memory for learning_model_forward.1']
  #allocation7 [shape = 'f32[1,1]{1,0:T(1,128)S(1)}', space=vmem, size = 0x200, scoped, tag = 'scoped memory for learning_model_forward.1']
  %s0 = inlined_call_operand.vmem [shape: s32[4,2], index: 0, kind: input, shape index: {}]
  %s1 = inlined_call_operand.vmem [shape: s32[4,2,2], index: 1, kind: input, shape index: {}]
  %s2 = inlined_call_operand.vmem [shape: s32[8], index: 2, kind: input, shape index: {}]
  %s3 = inlined_call_operand.vmem [shape: f32[16,32], index: 3, kind: input, shape index: {}]
  %s4 = inlined_call_operand.vmem [shape: f32[4,64,32], index: 4, kind: input, shape index: {}]
  %s5 = inlined_call_operand.vmem [shape: f32[4,1,32], index: 5, kind: input, shape index: {}]
  %s6 = inlined_call_operand.vmem [shape: f32[4,2,1], index: 6, kind: input, shape index: {}]
  %s7 = inlined_call_operand.vmem [shape: f32[32,1], index: 7, kind: input, shape index: {}]
  %s8 = inlined_call_operand.<no memory space> [shape: f32[1,1], index: 8, kind: input, shape index: {}]
  %s9 = inlined_call_operand.vmem [shape: f32[8,1], index: 9, kind: input, shape index: {}]
  %s10 = inlined_call_operand.vmem [shape: f32[8,1], index: 10, kind: input, shape index: {}]
  %s11 = inlined_call_operand.vmem [shape: f32[8,1], index: 11, kind: input, shape index: {}]
  %s12 = inlined_call_operand.<no memory space> [shape: f32[1,1], index: 12, kind: input, shape index: {}]
  %s13 = inlined_call_operand.vmem [shape: f32[1,8], index: 13, kind: output, shape index: {}]
  %s14 = sld [smem:[#allocation0]]
  $region50: #{learning_model_forward.1} parent=0
    _
  %s16 = ssub.s32 1, %s14
  %s17 = scalar_select 0, %s16, %s14
  %s18 = sshll.u32 %s0, 4
  %s19 = int_to_ptr.vmem [resolvable:$true] %s18
  %21 = dma.vmem_to_smem %s19, 64, [#allocation3], [#allocation2]
  %s22 = sshll.u32 %s1, 4
  %s23 = int_to_ptr.vmem [resolvable:$true] %s22
  %25 = dma.vmem_to_smem %s23, 128, [#allocation4], [#allocation2]
  %s26 = sshll.u32 %s2, 4
  %s27 = int_to_ptr.vmem [resolvable:$true] %s26
  %29 = dma.vmem_to_smem %s27, 16, [#allocation5], [#allocation2]
  %v30 = vstv %s8
  %31 = vst [vmem:[#allocation6] sm:$0x1] %v30
  %v32 = vstv %s12
  %33 = vst [vmem:[#allocation7] sm:$0x1] %v32
  %34 = dma.done [#allocation2], 208
  %35 = sfence
  // Predicated region
  $region2: #{learning_model_forward.1} parent=0 // pred_check
    _
  $region3: #{learning_model_forward.1} parent=0 // pred_check_branch
    %37 = sbr.rel (0) target = $region5
  $region4: #{learning_model_forward.1} parent=0 // pred_region
    _
  $region5: #{learning_model_forward.1} parent=0 // pred_fallthru
    _
  // Predicated region
  $region6: #{learning_model_forward.1} parent=0 // pred_check
    _
  $region7: #{learning_model_forward.1} parent=0 // pred_check_branch
    %39 = sbr.rel (0) target = $region9
  $region8: #{learning_model_forward.1} parent=0 // pred_region
    _
  $region9: #{learning_model_forward.1} parent=0 // pred_fallthru
    _
  // Predicated region
  $region10: #{learning_model_forward.1} parent=0 // pred_check
    _
  $region11: #{learning_model_forward.1} parent=0 // pred_check_branch
    %41 = sbr.rel (0) target = $region13
  $region12: #{learning_model_forward.1} parent=0 // pred_region
    _
  $region13: #{learning_model_forward.1} parent=0 // pred_fallthru
    _
  // Predicated region
  $region14: #{learning_model_forward.1} parent=0 // pred_check
    _
  $region15: #{learning_model_forward.1} parent=0 // pred_check_branch
    %43 = sbr.rel (0) target = $region17
  $region16: #{learning_model_forward.1} parent=0 // pred_region
    _
  $region17: #{learning_model_forward.1} parent=0 // pred_fallthru
    _
  // Predicated region
  $region18: #{learning_model_forward.1} parent=0 // pred_check
    _
  $region19: #{learning_model_forward.1} parent=0 // pred_check_branch
    %45 = sbr.rel (0) target = $region21
  $region20: #{learning_model_forward.1} parent=0 // pred_region
    _
  $region21: #{learning_model_forward.1} parent=0 // pred_fallthru
    _
  // Predicated region
  $region22: #{learning_model_forward.1} parent=0 // pred_check
    _
  $region23: #{learning_model_forward.1} parent=0 // pred_check_branch
    %47 = sbr.rel (0) target = $region25
  $region24: #{learning_model_forward.1} parent=0 // pred_region
    _
  $region25: #{learning_model_forward.1} parent=0 // pred_fallthru
    _
  // Predicated region
  $region26: #{learning_model_forward.1} parent=0 // pred_check
    _
  $region27: #{learning_model_forward.1} parent=0 // pred_check_branch
    %49 = sbr.rel (0) target = $region29
  $region28: #{learning_model_forward.1} parent=0 // pred_region
    _
  $region29: #{learning_model_forward.1} parent=0 // pred_fallthru
    _
  // Predicated region
  $region30: #{learning_model_forward.1} parent=0 // pred_check
    _
  $region31: #{learning_model_forward.1} parent=0 // pred_check_branch
    %51 = sbr.rel (0) target = $region33
  $region32: #{learning_model_forward.1} parent=0 // pred_region
    _
  $region33: #{learning_model_forward.1} parent=0 // pred_fallthru
    _
  // Predicated region
  $region34: #{learning_model_forward.1} parent=0 // pred_check
    _
  $region35: #{learning_model_forward.1} parent=0 // pred_check_branch
    %53 = sbr.rel (0) target = $region37
  $region36: #{learning_model_forward.1} parent=0 // pred_region
    _
  $region37: #{learning_model_forward.1} parent=0 // pred_fallthru
    _
  // Predicated region
  $region38: #{learning_model_forward.1} parent=0 // pred_check
    _
  $region39: #{learning_model_forward.1} parent=0 // pred_check_branch
    %55 = sbr.rel (0) target = $region41
  $region40: #{learning_model_forward.1} parent=0 // pred_region
    _
  $region41: #{learning_model_forward.1} parent=0 // pred_fallthru
    _
  %v56 = vld [vmem:[%s3] sm:$0xff]
  %v57 = vld [vmem:[%s3 + $0x8] sm:$0xff]
  %v58 = vlaneseq
  %v59 = vshrl.u32 %v58, 7
  %v60 = vadd.s32 %v59, 8
  %v61 = vlaneseq
  %v62 = vand.u32 %v61, 127
  %vm63 = vcmp.eq.s32.totalorder %v59, 0
  %s64 = sld [smem:[#allocation4]]
  %v65 = vstv %s64
  %v66 = vsel %vm63, %v65, 0
  %vm67 = vcmp.eq.s32.totalorder %v59, 2
  %s68 = sld [smem:[#allocation4 + $0x1]]
  %v69 = vstv %s68
  %v70 = vsel %vm67, %v69, %v66
  %vm71 = vcmp.eq.s32.totalorder %v59, 1
  %s72 = sld [smem:[#allocation4 + $0x80]]
  %v73 = vstv %s72
  %v74 = vsel %vm71, %v73, %v70
  %vm75 = vcmp.eq.s32.totalorder %v59, 3
  %s76 = sld [smem:[#allocation4 + $0x81]]
  %v77 = vstv %s76
  %v78 = vsel %vm75, %v77, %v74
  %vm79 = vcmp.eq.s32.totalorder %v62, %v78
  %v80 = vsel %vm79, 1, 0
  %v81 = vcvt.s32.f32 %v80
  %vm82 = vcmask 130048
  %v84 = vsel %vm82, %v81, 0
  %86 = vmatprep.subr.mxu0 0.0
  %87 = vmatpush1.msra.mxu0 0.0
  %88 = vmatprep.subr.mxu0 0.0
  %89 = vmatpush1.msra.mxu0 0.0
  %90 = vmatprep.subr.mxu0 0.0
  %91 = vmatpush1.msra.mxu0 0.0
  %92 = vmatprep.subr.mxu0 0.0
  %93 = vmatpush1.msra.mxu0 0.0
  %94 = vmatprep.subr.mxu0 0.0
  %95 = vmatpush1.msra.mxu0 0.0
  %96 = vmatprep.subr.mxu0 0.0
  %97 = vmatpush1.msra.mxu0 0.0
  %98 = vmatprep.subr.mxu0 0.0
  %99 = vmatpush1.msra.mxu0 0.0
  %100 = vmatprep.subr.mxu0 0.0
  %101 = vmatpush1.msra.mxu0 0.0
  %102 = vmatprep.subr.mxu0 0.0
  %103 = vmatpush1.msra.mxu0 0.0
  %104 = vmatprep.subr.mxu0 0.0
  %105 = vmatpush1.msra.mxu0 0.0
  %106 = vmatprep.subr.mxu0 0.0
  %107 = vmatpush1.msra.mxu0 0.0
  %108 = vmatprep.subr.mxu0 0.0
  %109 = vmatpush1.msra.mxu0 0.0
  %110 = vmatprep.subr.mxu0 0.0
  %111 = vmatpush1.msra.mxu0 0.0
  %112 = vmatprep.subr.mxu0 0.0
  %113 = vmatpush1.msra.mxu0 0.0
  %114 = vmatprep.subr.mxu0 0.0
  %115 = vmatpush1.msra.mxu0 %v57
  %116 = vmatprep.subr.mxu0 0.0
  %117 = vmatpush1.msra.mxu0 %v56
  %118 = vmatprep.subr.mxu0 0.0
  %119 = vmatpush2.msra.mxu0 0.0
  %120 = vmatprep.subr.mxu0 0.0
  %121 = vmatpush2.msra.mxu0 0.0
  %122 = vmatprep.subr.mxu0 0.0
  %123 = vmatpush2.msra.mxu0 0.0
  %124 = vmatprep.subr.mxu0 0.0
  %125 = vmatpush2.msra.mxu0 0.0
  %126 = vmatprep.subr.mxu0 0.0
  %127 = vmatpush2.msra.mxu0 0.0
  %128 = vmatprep.subr.mxu0 0.0
  %129 = vmatpush2.msra.mxu0 0.0
  %130 = vmatprep.subr.mxu0 0.0
  %131 = vmatpush2.msra.mxu0 0.0
  %132 = vmatprep.subr.mxu0 0.0
  %133 = vmatpush2.msra.mxu0 0.0
  %134 = vmatprep.subr.mxu0 0.0
  %135 = vmatpush2.msra.mxu0 0.0
  %136 = vmatprep.subr.mxu0 0.0
  %137 = vmatpush2.msra.mxu0 0.0
  %138 = vmatprep.subr.mxu0 0.0
  %139 = vmatpush2.msra.mxu0 0.0
  %140 = vmatprep.subr.mxu0 0.0
  %141 = vmatpush2.msra.mxu0 0.0
  %142 = vmatprep.subr.mxu0 0.0
  %143 = vmatpush2.msra.mxu0 0.0
  %144 = vmatprep.subr.mxu0 0.0
  %145 = vmatpush2.msra.mxu0 0.0
  %146 = vmatprep.subr.mxu0 0.0
  %147 = vmatpush2.msra.mxu0 0.0
  %148 = vmatprep.subr.mxu0 0.0
  %149 = vmatpush2.msra.mxu0 0.0
  %150 = vmatprep.mubr.f32.mxu0 0.0
  %151 = vmatmul.mubr.f32.gmra.mxu0 %v84
  %v152 = vpop.f32.mrf.mxu0
  %v153 = vadd.f32 0.0, %v152
  %v154 = vpop.f32.mrf.mxu0
  %155 = vdwg.mxu0
  %v157 = vrot.slane %v153, 2
  %158 = vrot.lane.b32.xlu0 %v157, 32
  %v159 = vpop.permute.xlu0 %158
  %vm161 = vcmask 261120
  %v162 = vsel %vm161, %v153, %v159
  %v163 = vld [vmem:[%s4] sm:$0xff]
  %v164 = vld [vmem:[%s4 + $0x8] sm:$0xff]
  %v165 = vld [vmem:[%s4 + $0x10] sm:$0xff]
  %v166 = vld [vmem:[%s4 + $0x18] sm:$0xff]
  %v167 = vld [vmem:[%s4 + $0x20] sm:$0xff]
  %v168 = vld [vmem:[%s4 + $0x28] sm:$0xff]
  %v169 = vld [vmem:[%s4 + $0x30] sm:$0xff]
  %v170 = vld [vmem:[%s4 + $0x38] sm:$0xff]
  %v171 = vld [vmem:[%s5] sm:$0x1]
  %v173 = vlaneseq
  %v174 = vshrl.u32 %v173, 7
  %v175 = vsub.s32 0, %v174
  %v176 = vrot.slane %v171, %v175
  %vm178 = vcmask 523264
  %v180 = vsel %vm178, %v162, 0
  %182 = vmatprep.subr.mxu0 0.0
  %183 = vmatpush1.msra.mxu0 0.0
  %184 = vmatprep.subr.mxu0 0.0
  %185 = vmatpush1.msra.mxu0 0.0
  %186 = vmatprep.subr.mxu0 0.0
  %187 = vmatpush1.msra.mxu0 0.0
  %188 = vmatprep.subr.mxu0 0.0
  %189 = vmatpush1.msra.mxu0 0.0
  %190 = vmatprep.subr.mxu0 0.0
  %191 = vmatpush1.msra.mxu0 0.0
  %192 = vmatprep.subr.mxu0 0.0
  %193 = vmatpush1.msra.mxu0 0.0
  %194 = vmatprep.subr.mxu0 0.0
  %195 = vmatpush1.msra.mxu0 0.0
  %196 = vmatprep.subr.mxu0 0.0
  %197 = vmatpush1.msra.mxu0 0.0
  %198 = vmatprep.subr.mxu0 0.0
  %199 = vmatpush1.msra.mxu0 %v170
  %200 = vmatprep.subr.mxu0 0.0
  %201 = vmatpush1.msra.mxu0 %v169
  %202 = vmatprep.subr.mxu0 0.0
  %203 = vmatpush1.msra.mxu0 %v168
  %204 = vmatprep.subr.mxu0 0.0
  %205 = vmatpush1.msra.mxu0 %v167
  %206 = vmatprep.subr.mxu0 0.0
  %207 = vmatpush1.msra.mxu0 %v166
  %208 = vmatprep.subr.mxu0 0.0
  %209 = vmatpush1.msra.mxu0 %v165
  %210 = vmatprep.subr.mxu0 0.0
  %211 = vmatpush1.msra.mxu0 %v164
  %212 = vmatprep.subr.mxu0 0.0
  %213 = vmatpush1.msra.mxu0 %v163
  %214 = vmatprep.subr.mxu0 0.0
  %215 = vmatpush2.msra.mxu0 0.0
  %216 = vmatprep.subr.mxu0 0.0
  %217 = vmatpush2.msra.mxu0 0.0
  %218 = vmatprep.subr.mxu0 0.0
  %219 = vmatpush2.msra.mxu0 0.0
  %220 = vmatprep.subr.mxu0 0.0
  %221 = vmatpush2.msra.mxu0 0.0
  %222 = vmatprep.subr.mxu0 0.0
  %223 = vmatpush2.msra.mxu0 0.0
  %224 = vmatprep.subr.mxu0 0.0
  %225 = vmatpush2.msra.mxu0 0.0
  %226 = vmatprep.subr.mxu0 0.0
  %227 = vmatpush2.msra.mxu0 0.0
  %228 = vmatprep.subr.mxu0 0.0
  %229 = vmatpush2.msra.mxu0 0.0
  %230 = vmatprep.subr.mxu0 0.0
  %231 = vmatpush2.msra.mxu0 0.0
  %232 = vmatprep.subr.mxu0 0.0
  %233 = vmatpush2.msra.mxu0 0.0
  %234 = vmatprep.subr.mxu0 0.0
  %235 = vmatpush2.msra.mxu0 0.0
  %236 = vmatprep.subr.mxu0 0.0
  %237 = vmatpush2.msra.mxu0 0.0
  %238 = vmatprep.subr.mxu0 0.0
  %239 = vmatpush2.msra.mxu0 0.0
  %240 = vmatprep.subr.mxu0 0.0
  %241 = vmatpush2.msra.mxu0 0.0
  %242 = vmatprep.subr.mxu0 0.0
  %243 = vmatpush2.msra.mxu0 0.0
  %244 = vmatprep.subr.mxu0 0.0
  %245 = vmatpush2.msra.mxu0 0.0
  %246 = vmatprep.mubr.f32.mxu0 0.0
  %247 = vmatmul.mubr.f32.gmra.mxu0 %v180
  %v248 = vpop.f32.mrf.mxu0
  %v249 = vadd.f32 %v176, %v248
  %v250 = vpop.f32.mrf.mxu0
  %251 = vdwg.mxu0
  %v252 = vmax.f32 %v249, 0.0
  %v253 = vld [vmem:[%s6] sm:$0x3]
  %255 = vset.pattern.permute.xlu0 0
  %256 = vperm.xlu0 %255, %v253
  %v257 = vpop.permute.xlu0 %256
  %v259 = vadd.f32 %v252, %v257
  %s260 = sld [smem:[#allocation3]]
  %v261 = vstv %s260
  %vm262 = vcmp.eq.s32.totalorder %v59, %v261
  %vm263 = vcmp.eq.s32.totalorder %v60, %v261
  %v264 = vsel %vm262, 1, 0
  %v265 = vsel %vm263, 1, 0
  %vm266 = vcmp.eq.s32.totalorder %v264, 1
  %vm267 = vcmp.eq.s32.totalorder %v265, 1
  %v268 = vlaneseq
  %v269 = vshrl.u32 %v268, 7
  %v270 = vsub.s32 0, %v269
  %v271 = vrot.slane %v259, %v270
  %v272 = vsel %vm266, %v271, %v56
  %v273 = vsel %vm267, %v271, %v57
  %s274 = sld [smem:[#allocation3 + $0x1]]
  %v275 = vstv %s274
  %vm276 = vcmp.eq.s32.totalorder %v59, %v275
  %vm277 = vcmp.eq.s32.totalorder %v60, %v275
  %v278 = vsel %vm276, 1, 0
  %v279 = vsel %vm277, 1, 0
  %vm280 = vcmp.eq.s32.totalorder %v278, 1
  %vm281 = vcmp.eq.s32.totalorder %v279, 1
  %v282 = vlaneseq
  %v283 = vshrl.u32 %v282, 7
  %v284 = vsub.s32 1, %v283
  %v285 = vrot.slane %v259, %v284
  %v286 = vsel %vm280, %v285, %v272
  %v287 = vsel %vm281, %v285, %v273
  %s288 = sld [smem:[#allocation4 + $0x100]]
  %v289 = vstv %s288
  %v290 = vsel %vm63, %v289, 0
  %s291 = sld [smem:[#allocation4 + $0x101]]
  %v292 = vstv %s291
  %v293 = vsel %vm67, %v292, %v290
  %s294 = sld [smem:[#allocation4 + $0x180]]
  %v295 = vstv %s294
  %v296 = vsel %vm71, %v295, %v293
  %s297 = sld [smem:[#allocation4 + $0x181]]
  %v298 = vstv %s297
  %v299 = vsel %vm75, %v298, %v296
  %vm300 = vcmp.eq.s32.totalorder %v62, %v299
  %v301 = vsel %vm300, 1, 0
  %v302 = vcvt.s32.f32 %v301
  %v304 = vsel %vm82, %v302, 0
  %306 = vmatprep.subr.mxu0 0.0
  %307 = vmatpush1.msra.mxu0 0.0
  %308 = vmatprep.subr.mxu0 0.0
  %309 = vmatpush1.msra.mxu0 0.0
  %310 = vmatprep.subr.mxu0 0.0
  %311 = vmatpush1.msra.mxu0 0.0
  %312 = vmatprep.subr.mxu0 0.0
  %313 = vmatpush1.msra.mxu0 0.0
  %314 = vmatprep.subr.mxu0 0.0
  %315 = vmatpush1.msra.mxu0 0.0
  %316 = vmatprep.subr.mxu0 0.0
  %317 = vmatpush1.msra.mxu0 0.0
  %318 = vmatprep.subr.mxu0 0.0
  %319 = vmatpush1.msra.mxu0 0.0
  %320 = vmatprep.subr.mxu0 0.0
  %321 = vmatpush1.msra.mxu0 0.0
  %322 = vmatprep.subr.mxu0 0.0
  %323 = vmatpush1.msra.mxu0 0.0
  %324 = vmatprep.subr.mxu0 0.0
  %325 = vmatpush1.msra.mxu0 0.0
  %326 = vmatprep.subr.mxu0 0.0
  %327 = vmatpush1.msra.mxu0 0.0
  %328 = vmatprep.subr.mxu0 0.0
  %329 = vmatpush1.msra.mxu0 0.0
  %330 = vmatprep.subr.mxu0 0.0
  %331 = vmatpush1.msra.mxu0 0.0
  %332 = vmatprep.subr.mxu0 0.0
  %333 = vmatpush1.msra.mxu0 0.0
  %334 = vmatprep.subr.mxu0 0.0
  %335 = vmatpush1.msra.mxu0 %v287
  %336 = vmatprep.subr.mxu0 0.0
  %337 = vmatpush1.msra.mxu0 %v286
  %338 = vmatprep.subr.mxu0 0.0
  %339 = vmatpush2.msra.mxu0 0.0
  %340 = vmatprep.subr.mxu0 0.0
  %341 = vmatpush2.msra.mxu0 0.0
  %342 = vmatprep.subr.mxu0 0.0
  %343 = vmatpush2.msra.mxu0 0.0
  %344 = vmatprep.subr.mxu0 0.0
  %345 = vmatpush2.msra.mxu0 0.0
  %346 = vmatprep.subr.mxu0 0.0
  %347 = vmatpush2.msra.mxu0 0.0
  %348 = vmatprep.subr.mxu0 0.0
  %349 = vmatpush2.msra.mxu0 0.0
  %350 = vmatprep.subr.mxu0 0.0
  %351 = vmatpush2.msra.mxu0 0.0
  %352 = vmatprep.subr.mxu0 0.0
  %353 = vmatpush2.msra.mxu0 0.0
  %354 = vmatprep.subr.mxu0 0.0
  %355 = vmatpush2.msra.mxu0 0.0
  %356 = vmatprep.subr.mxu0 0.0
  %357 = vmatpush2.msra.mxu0 0.0
  %358 = vmatprep.subr.mxu0 0.0
  %359 = vmatpush2.msra.mxu0 0.0
  %360 = vmatprep.subr.mxu0 0.0
  %361 = vmatpush2.msra.mxu0 0.0
  %362 = vmatprep.subr.mxu0 0.0
  %363 = vmatpush2.msra.mxu0 0.0
  %364 = vmatprep.subr.mxu0 0.0
  %365 = vmatpush2.msra.mxu0 0.0
  %366 = vmatprep.subr.mxu0 0.0
  %367 = vmatpush2.msra.mxu0 0.0
  %368 = vmatprep.subr.mxu0 0.0
  %369 = vmatpush2.msra.mxu0 0.0
  %370 = vmatprep.mubr.f32.mxu0 0.0
  %371 = vmatmul.mubr.f32.gmra.mxu0 %v304
  %v372 = vpop.f32.mrf.mxu0
  %v373 = vadd.f32 0.0, %v372
  %v374 = vpop.f32.mrf.mxu0
  %375 = vdwg.mxu0
  %v377 = vrot.slane %v373, 2
  %378 = vrot.lane.b32.xlu0 %v377, 32
  %v379 = vpop.permute.xlu0 %378
  %v381 = vsel %vm161, %v373, %v379
  %s382 = scalar_lea.vmem %s4, 64
  %v383 = vld [vmem:[%s382] sm:$0xff]
  %v384 = vld [vmem:[%s382 + $0x8] sm:$0xff]
  %v385 = vld [vmem:[%s382 + $0x10] sm:$0xff]
  %v386 = vld [vmem:[%s382 + $0x18] sm:$0xff]
  %v387 = vld [vmem:[%s382 + $0x20] sm:$0xff]
  %v388 = vld [vmem:[%s382 + $0x28] sm:$0xff]
  %v389 = vld [vmem:[%s382 + $0x30] sm:$0xff]
  %v390 = vld [vmem:[%s382 + $0x38] sm:$0xff]
  %s391 = scalar_lea.vmem %s5, 1
  %v392 = vld [vmem:[%s391] sm:$0x1]
  %v394 = vlaneseq
  %v395 = vshrl.u32 %v394, 7
  %v396 = vsub.s32 0, %v395
  %v397 = vrot.slane %v392, %v396
  %v400 = vsel %vm178, %v381, 0
  %402 = vmatprep.subr.mxu0 0.0
  %403 = vmatpush1.msra.mxu0 0.0
  %404 = vmatprep.subr.mxu0 0.0
  %405 = vmatpush1.msra.mxu0 0.0
  %406 = vmatprep.subr.mxu0 0.0
  %407 = vmatpush1.msra.mxu0 0.0
  %408 = vmatprep.subr.mxu0 0.0
  %409 = vmatpush1.msra.mxu0 0.0
  %410 = vmatprep.subr.mxu0 0.0
  %411 = vmatpush1.msra.mxu0 0.0
  %412 = vmatprep.subr.mxu0 0.0
  %413 = vmatpush1.msra.mxu0 0.0
  %414 = vmatprep.subr.mxu0 0.0
  %415 = vmatpush1.msra.mxu0 0.0
  %416 = vmatprep.subr.mxu0 0.0
  %417 = vmatpush1.msra.mxu0 0.0
  %418 = vmatprep.subr.mxu0 0.0
  %419 = vmatpush1.msra.mxu0 %v390
  %420 = vmatprep.subr.mxu0 0.0
  %421 = vmatpush1.msra.mxu0 %v389
  %422 = vmatprep.subr.mxu0 0.0
  %423 = vmatpush1.msra.mxu0 %v388
  %424 = vmatprep.subr.mxu0 0.0
  %425 = vmatpush1.msra.mxu0 %v387
  %426 = vmatprep.subr.mxu0 0.0
  %427 = vmatpush1.msra.mxu0 %v386
  %428 = vmatprep.subr.mxu0 0.0
  %429 = vmatpush1.msra.mxu0 %v385
  %430 = vmatprep.subr.mxu0 0.0
  %431 = vmatpush1.msra.mxu0 %v384
  %432 = vmatprep.subr.mxu0 0.0
  %433 = vmatpush1.msra.mxu0 %v383
  %434 = vmatprep.subr.mxu0 0.0
  %435 = vmatpush2.msra.mxu0 0.0
  %436 = vmatprep.subr.mxu0 0.0
  %437 = vmatpush2.msra.mxu0 0.0
  %438 = vmatprep.subr.mxu0 0.0
  %439 = vmatpush2.msra.mxu0 0.0
  %440 = vmatprep.subr.mxu0 0.0
  %441 = vmatpush2.msra.mxu0 0.0
  %442 = vmatprep.subr.mxu0 0.0
  %443 = vmatpush2.msra.mxu0 0.0
  %444 = vmatprep.subr.mxu0 0.0
  %445 = vmatpush2.msra.mxu0 0.0
  %446 = vmatprep.subr.mxu0 0.0
  %447 = vmatpush2.msra.mxu0 0.0
  %448 = vmatprep.subr.mxu0 0.0
  %449 = vmatpush2.msra.mxu0 0.0
  %450 = vmatprep.subr.mxu0 0.0
  %451 = vmatpush2.msra.mxu0 0.0
  %452 = vmatprep.subr.mxu0 0.0
  %453 = vmatpush2.msra.mxu0 0.0
  %454 = vmatprep.subr.mxu0 0.0
  %455 = vmatpush2.msra.mxu0 0.0
  %456 = vmatprep.subr.mxu0 0.0
  %457 = vmatpush2.msra.mxu0 0.0
  %458 = vmatprep.subr.mxu0 0.0
  %459 = vmatpush2.msra.mxu0 0.0
  %460 = vmatprep.subr.mxu0 0.0
  %461 = vmatpush2.msra.mxu0 0.0
  %462 = vmatprep.subr.mxu0 0.0
  %463 = vmatpush2.msra.mxu0 0.0
  %464 = vmatprep.subr.mxu0 0.0
  %465 = vmatpush2.msra.mxu0 0.0
  %466 = vmatprep.mubr.f32.mxu0 0.0
  %467 = vmatmul.mubr.f32.gmra.mxu0 %v400
  %v468 = vpop.f32.mrf.mxu0
  %v469 = vadd.f32 %v397, %v468
  %v470 = vpop.f32.mrf.mxu0
  %471 = vdwg.mxu0
  %v472 = vmax.f32 %v469, 0.0
  %s473 = scalar_lea.vmem %s6, 2
  %v474 = vld [vmem:[%s473] sm:$0x3]
  %476 = vset.pattern.permute.xlu0 0
  %477 = vperm.xlu0 %476, %v474
  %v478 = vpop.permute.xlu0 %477
  %v480 = vadd.f32 %v472, %v478
  %s481 = sld [smem:[#allocation3 + $0x80]]
  %v482 = vstv %s481
  %vm483 = vcmp.eq.s32.totalorder %v59, %v482
  %vm484 = vcmp.eq.s32.totalorder %v60, %v482
  %v485 = vsel %vm483, 1, 0
  %v486 = vsel %vm484, 1, 0
  %vm487 = vcmp.eq.s32.totalorder %v485, 1
  %vm488 = vcmp.eq.s32.totalorder %v486, 1
  %v489 = vlaneseq
  %v490 = vshrl.u32 %v489, 7
  %v491 = vsub.s32 0, %v490
  %v492 = vrot.slane %v480, %v491
  %v493 = vsel %vm487, %v492, %v286
  %v494 = vsel %vm488, %v492, %v287
  %s495 = sld [smem:[#allocation3 + $0x81]]
  %v496 = vstv %s495
  %vm497 = vcmp.eq.s32.totalorder %v59, %v496
  %vm498 = vcmp.eq.s32.totalorder %v60, %v496
  %v499 = vsel %vm497, 1, 0
  %v500 = vsel %vm498, 1, 0
  %vm501 = vcmp.eq.s32.totalorder %v499, 1
  %vm502 = vcmp.eq.s32.totalorder %v500, 1
  %v503 = vlaneseq
  %v504 = vshrl.u32 %v503, 7
  %v505 = vsub.s32 1, %v504
  %v506 = vrot.slane %v480, %v505
  %v507 = vsel %vm501, %v506, %v493
  %v508 = vsel %vm502, %v506, %v494
  %s509 = sld [smem:[#allocation4 + $0x200]]
  %v510 = vstv %s509
  %v511 = vsel %vm63, %v510, 0
  %s512 = sld [smem:[#allocation4 + $0x201]]
  %v513 = vstv %s512
  %v514 = vsel %vm67, %v513, %v511
  %s515 = sld [smem:[#allocation4 + $0x280]]
  %v516 = vstv %s515
  %v517 = vsel %vm71, %v516, %v514
  %s518 = sld [smem:[#allocation4 + $0x281]]
  %v519 = vstv %s518
  %v520 = vsel %vm75, %v519, %v517
  %vm521 = vcmp.eq.s32.totalorder %v62, %v520
  %v522 = vsel %vm521, 1, 0
  %v523 = vcvt.s32.f32 %v522
  %v525 = vsel %vm82, %v523, 0
  %527 = vmatprep.subr.mxu0 0.0
  %528 = vmatpush1.msra.mxu0 0.0
  %529 = vmatprep.subr.mxu0 0.0
  %530 = vmatpush1.msra.mxu0 0.0
  %531 = vmatprep.subr.mxu0 0.0
  %532 = vmatpush1.msra.mxu0 0.0
  %533 = vmatprep.subr.mxu0 0.0
  %534 = vmatpush1.msra.mxu0 0.0
  %535 = vmatprep.subr.mxu0 0.0
  %536 = vmatpush1.msra.mxu0 0.0
  %537 = vmatprep.subr.mxu0 0.0
  %538 = vmatpush1.msra.mxu0 0.0
  %539 = vmatprep.subr.mxu0 0.0
  %540 = vmatpush1.msra.mxu0 0.0
  %541 = vmatprep.subr.mxu0 0.0
  %542 = vmatpush1.msra.mxu0 0.0
  %543 = vmatprep.subr.mxu0 0.0
  %544 = vmatpush1.msra.mxu0 0.0
  %545 = vmatprep.subr.mxu0 0.0
  %546 = vmatpush1.msra.mxu0 0.0
  %547 = vmatprep.subr.mxu0 0.0
  %548 = vmatpush1.msra.mxu0 0.0
  %549 = vmatprep.subr.mxu0 0.0
  %550 = vmatpush1.msra.mxu0 0.0
  %551 = vmatprep.subr.mxu0 0.0
  %552 = vmatpush1.msra.mxu0 0.0
  %553 = vmatprep.subr.mxu0 0.0
  %554 = vmatpush1.msra.mxu0 0.0
  %555 = vmatprep.subr.mxu0 0.0
  %556 = vmatpush1.msra.mxu0 %v508
  %557 = vmatprep.subr.mxu0 0.0
  %558 = vmatpush1.msra.mxu0 %v507
  %559 = vmatprep.subr.mxu0 0.0
  %560 = vmatpush2.msra.mxu0 0.0
  %561 = vmatprep.subr.mxu0 0.0
  %562 = vmatpush2.msra.mxu0 0.0
  %563 = vmatprep.subr.mxu0 0.0
  %564 = vmatpush2.msra.mxu0 0.0
  %565 = vmatprep.subr.mxu0 0.0
  %566 = vmatpush2.msra.mxu0 0.0
  %567 = vmatprep.subr.mxu0 0.0
  %568 = vmatpush2.msra.mxu0 0.0
  %569 = vmatprep.subr.mxu0 0.0
  %570 = vmatpush2.msra.mxu0 0.0
  %571 = vmatprep.subr.mxu0 0.0
  %572 = vmatpush2.msra.mxu0 0.0
  %573 = vmatprep.subr.mxu0 0.0
  %574 = vmatpush2.msra.mxu0 0.0
  %575 = vmatprep.subr.mxu0 0.0
  %576 = vmatpush2.msra.mxu0 0.0
  %577 = vmatprep.subr.mxu0 0.0
  %578 = vmatpush2.msra.mxu0 0.0
  %579 = vmatprep.subr.mxu0 0.0
  %580 = vmatpush2.msra.mxu0 0.0
  %581 = vmatprep.subr.mxu0 0.0
  %582 = vmatpush2.msra.mxu0 0.0
  %583 = vmatprep.subr.mxu0 0.0
  %584 = vmatpush2.msra.mxu0 0.0
  %585 = vmatprep.subr.mxu0 0.0
  %586 = vmatpush2.msra.mxu0 0.0
  %587 = vmatprep.subr.mxu0 0.0
  %588 = vmatpush2.msra.mxu0 0.0
  %589 = vmatprep.subr.mxu0 0.0
  %590 = vmatpush2.msra.mxu0 0.0
  %591 = vmatprep.mubr.f32.mxu0 0.0
  %592 = vmatmul.mubr.f32.gmra.mxu0 %v525
  %v593 = vpop.f32.mrf.mxu0
  %v594 = vadd.f32 0.0, %v593
  %v595 = vpop.f32.mrf.mxu0
  %596 = vdwg.mxu0
  %v598 = vrot.slane %v594, 2
  %599 = vrot.lane.b32.xlu0 %v598, 32
  %v600 = vpop.permute.xlu0 %599
  %v602 = vsel %vm161, %v594, %v600
  %s603 = scalar_lea.vmem %s4, 128
  %v604 = vld [vmem:[%s603] sm:$0xff]
  %v605 = vld [vmem:[%s603 + $0x8] sm:$0xff]
  %v606 = vld [vmem:[%s603 + $0x10] sm:$0xff]
  %v607 = vld [vmem:[%s603 + $0x18] sm:$0xff]
  %v608 = vld [vmem:[%s603 + $0x20] sm:$0xff]
  %v609 = vld [vmem:[%s603 + $0x28] sm:$0xff]
  %v610 = vld [vmem:[%s603 + $0x30] sm:$0xff]
  %v611 = vld [vmem:[%s603 + $0x38] sm:$0xff]
  %s612 = scalar_lea.vmem %s5, 2
  %v613 = vld [vmem:[%s612] sm:$0x1]
  %v615 = vlaneseq
  %v616 = vshrl.u32 %v615, 7
  %v617 = vsub.s32 0, %v616
  %v618 = vrot.slane %v613, %v617
  %v621 = vsel %vm178, %v602, 0
  %623 = vmatprep.subr.mxu0 0.0
  %624 = vmatpush1.msra.mxu0 0.0
  %625 = vmatprep.subr.mxu0 0.0
  %626 = vmatpush1.msra.mxu0 0.0
  %627 = vmatprep.subr.mxu0 0.0
  %628 = vmatpush1.msra.mxu0 0.0
  %629 = vmatprep.subr.mxu0 0.0
  %630 = vmatpush1.msra.mxu0 0.0
  %631 = vmatprep.subr.mxu0 0.0
  %632 = vmatpush1.msra.mxu0 0.0
  %633 = vmatprep.subr.mxu0 0.0
  %634 = vmatpush1.msra.mxu0 0.0
  %635 = vmatprep.subr.mxu0 0.0
  %636 = vmatpush1.msra.mxu0 0.0
  %637 = vmatprep.subr.mxu0 0.0
  %638 = vmatpush1.msra.mxu0 0.0
  %639 = vmatprep.subr.mxu0 0.0
  %640 = vmatpush1.msra.mxu0 %v611
  %641 = vmatprep.subr.mxu0 0.0
  %642 = vmatpush1.msra.mxu0 %v610
  %643 = vmatprep.subr.mxu0 0.0
  %644 = vmatpush1.msra.mxu0 %v609
  %645 = vmatprep.subr.mxu0 0.0
  %646 = vmatpush1.msra.mxu0 %v608
  %647 = vmatprep.subr.mxu0 0.0
  %648 = vmatpush1.msra.mxu0 %v607
  %649 = vmatprep.subr.mxu0 0.0
  %650 = vmatpush1.msra.mxu0 %v606
  %651 = vmatprep.subr.mxu0 0.0
  %652 = vmatpush1.msra.mxu0 %v605
  %653 = vmatprep.subr.mxu0 0.0
  %654 = vmatpush1.msra.mxu0 %v604
  %655 = vmatprep.subr.mxu0 0.0
  %656 = vmatpush2.msra.mxu0 0.0
  %657 = vmatprep.subr.mxu0 0.0
  %658 = vmatpush2.msra.mxu0 0.0
  %659 = vmatprep.subr.mxu0 0.0
  %660 = vmatpush2.msra.mxu0 0.0
  %661 = vmatprep.subr.mxu0 0.0
  %662 = vmatpush2.msra.mxu0 0.0
  %663 = vmatprep.subr.mxu0 0.0
  %664 = vmatpush2.msra.mxu0 0.0
  %665 = vmatprep.subr.mxu0 0.0
  %666 = vmatpush2.msra.mxu0 0.0
  %667 = vmatprep.subr.mxu0 0.0
  %668 = vmatpush2.msra.mxu0 0.0
  %669 = vmatprep.subr.mxu0 0.0
  %670 = vmatpush2.msra.mxu0 0.0
  %671 = vmatprep.subr.mxu0 0.0
  %672 = vmatpush2.msra.mxu0 0.0
  %673 = vmatprep.subr.mxu0 0.0
  %674 = vmatpush2.msra.mxu0 0.0
  %675 = vmatprep.subr.mxu0 0.0
  %676 = vmatpush2.msra.mxu0 0.0
  %677 = vmatprep.subr.mxu0 0.0
  %678 = vmatpush2.msra.mxu0 0.0
  %679 = vmatprep.subr.mxu0 0.0
  %680 = vmatpush2.msra.mxu0 0.0
  %681 = vmatprep.subr.mxu0 0.0
  %682 = vmatpush2.msra.mxu0 0.0
  %683 = vmatprep.subr.mxu0 0.0
  %684 = vmatpush2.msra.mxu0 0.0
  %685 = vmatprep.subr.mxu0 0.0
  %686 = vmatpush2.msra.mxu0 0.0
  %687 = vmatprep.mubr.f32.mxu0 0.0
  %688 = vmatmul.mubr.f32.gmra.mxu0 %v621
  %v689 = vpop.f32.mrf.mxu0
  %v690 = vadd.f32 %v618, %v689
  %v691 = vpop.f32.mrf.mxu0
  %692 = vdwg.mxu0
  %v693 = vmax.f32 %v690, 0.0
  %s694 = scalar_lea.vmem %s6, 4
  %v695 = vld [vmem:[%s694] sm:$0x3]
  %697 = vset.pattern.permute.xlu0 0
  %698 = vperm.xlu0 %697, %v695
  %v699 = vpop.permute.xlu0 %698
  %v701 = vadd.f32 %v693, %v699
  %s702 = sld [smem:[#allocation3 + $0x100]]
  %v703 = vstv %s702
  %vm704 = vcmp.eq.s32.totalorder %v59, %v703
  %vm705 = vcmp.eq.s32.totalorder %v60, %v703
  %v706 = vsel %vm704, 1, 0
  %v707 = vsel %vm705, 1, 0
  %vm708 = vcmp.eq.s32.totalorder %v706, 1
  %vm709 = vcmp.eq.s32.totalorder %v707, 1
  %v710 = vlaneseq
  %v711 = vshrl.u32 %v710, 7
  %v712 = vsub.s32 0, %v711
  %v713 = vrot.slane %v701, %v712
  %v714 = vsel %vm708, %v713, %v507
  %v715 = vsel %vm709, %v713, %v508
  %s716 = sld [smem:[#allocation3 + $0x101]]
  %v717 = vstv %s716
  %vm718 = vcmp.eq.s32.totalorder %v59, %v717
  %vm719 = vcmp.eq.s32.totalorder %v60, %v717
  %v720 = vsel %vm718, 1, 0
  %v721 = vsel %vm719, 1, 0
  %vm722 = vcmp.eq.s32.totalorder %v720, 1
  %vm723 = vcmp.eq.s32.totalorder %v721, 1
  %v724 = vlaneseq
  %v725 = vshrl.u32 %v724, 7
  %v726 = vsub.s32 1, %v725
  %v727 = vrot.slane %v701, %v726
  %v728 = vsel %vm722, %v727, %v714
  %v729 = vsel %vm723, %v727, %v715
  %s730 = sld [smem:[#allocation4 + $0x300]]
  %v731 = vstv %s730
  %v732 = vsel %vm63, %v731, 0
  %s733 = sld [smem:[#allocation4 + $0x301]]
  %v734 = vstv %s733
  %v735 = vsel %vm67, %v734, %v732
  %s736 = sld [smem:[#allocation4 + $0x380]]
  %v737 = vstv %s736
  %v738 = vsel %vm71, %v737, %v735
  %s739 = sld [smem:[#allocation4 + $0x381]]
  %v740 = vstv %s739
  %v741 = vsel %vm75, %v740, %v738
  %vm742 = vcmp.eq.s32.totalorder %v62, %v741
  %v743 = vsel %vm742, 1, 0
  %v744 = vcvt.s32.f32 %v743
  %v746 = vsel %vm82, %v744, 0
  %748 = vmatprep.subr.mxu0 0.0
  %749 = vmatpush1.msra.mxu0 0.0
  %750 = vmatprep.subr.mxu0 0.0
  %751 = vmatpush1.msra.mxu0 0.0
  %752 = vmatprep.subr.mxu0 0.0
  %753 = vmatpush1.msra.mxu0 0.0
  %754 = vmatprep.subr.mxu0 0.0
  %755 = vmatpush1.msra.mxu0 0.0
  %756 = vmatprep.subr.mxu0 0.0
  %757 = vmatpush1.msra.mxu0 0.0
  %758 = vmatprep.subr.mxu0 0.0
  %759 = vmatpush1.msra.mxu0 0.0
  %760 = vmatprep.subr.mxu0 0.0
  %761 = vmatpush1.msra.mxu0 0.0
  %762 = vmatprep.subr.mxu0 0.0
  %763 = vmatpush1.msra.mxu0 0.0
  %764 = vmatprep.subr.mxu0 0.0
  %765 = vmatpush1.msra.mxu0 0.0
  %766 = vmatprep.subr.mxu0 0.0
  %767 = vmatpush1.msra.mxu0 0.0
  %768 = vmatprep.subr.mxu0 0.0
  %769 = vmatpush1.msra.mxu0 0.0
  %770 = vmatprep.subr.mxu0 0.0
  %771 = vmatpush1.msra.mxu0 0.0
  %772 = vmatprep.subr.mxu0 0.0
  %773 = vmatpush1.msra.mxu0 0.0
  %774 = vmatprep.subr.mxu0 0.0
  %775 = vmatpush1.msra.mxu0 0.0
  %776 = vmatprep.subr.mxu0 0.0
  %777 = vmatpush1.msra.mxu0 %v729
  %778 = vmatprep.subr.mxu0 0.0
  %779 = vmatpush1.msra.mxu0 %v728
  %780 = vmatprep.subr.mxu0 0.0
  %781 = vmatpush2.msra.mxu0 0.0
  %782 = vmatprep.subr.mxu0 0.0
  %783 = vmatpush2.msra.mxu0 0.0
  %784 = vmatprep.subr.mxu0 0.0
  %785 = vmatpush2.msra.mxu0 0.0
  %786 = vmatprep.subr.mxu0 0.0
  %787 = vmatpush2.msra.mxu0 0.0
  %788 = vmatprep.subr.mxu0 0.0
  %789 = vmatpush2.msra.mxu0 0.0
  %790 = vmatprep.subr.mxu0 0.0
  %791 = vmatpush2.msra.mxu0 0.0
  %792 = vmatprep.subr.mxu0 0.0
  %793 = vmatpush2.msra.mxu0 0.0
  %794 = vmatprep.subr.mxu0 0.0
  %795 = vmatpush2.msra.mxu0 0.0
  %796 = vmatprep.subr.mxu0 0.0
  %797 = vmatpush2.msra.mxu0 0.0
  %798 = vmatprep.subr.mxu0 0.0
  %799 = vmatpush2.msra.mxu0 0.0
  %800 = vmatprep.subr.mxu0 0.0
  %801 = vmatpush2.msra.mxu0 0.0
  %802 = vmatprep.subr.mxu0 0.0
  %803 = vmatpush2.msra.mxu0 0.0
  %804 = vmatprep.subr.mxu0 0.0
  %805 = vmatpush2.msra.mxu0 0.0
  %806 = vmatprep.subr.mxu0 0.0
  %807 = vmatpush2.msra.mxu0 0.0
  %808 = vmatprep.subr.mxu0 0.0
  %809 = vmatpush2.msra.mxu0 0.0
  %810 = vmatprep.subr.mxu0 0.0
  %811 = vmatpush2.msra.mxu0 0.0
  %812 = vmatprep.mubr.f32.mxu0 0.0
  %813 = vmatmul.mubr.f32.gmra.mxu0 %v746
  %v814 = vpop.f32.mrf.mxu0
  %v815 = vadd.f32 0.0, %v814
  %v816 = vpop.f32.mrf.mxu0
  %817 = vdwg.mxu0
  %v819 = vrot.slane %v815, 2
  %820 = vrot.lane.b32.xlu0 %v819, 32
  %v821 = vpop.permute.xlu0 %820
  %v823 = vsel %vm161, %v815, %v821
  %s824 = scalar_lea.vmem %s4, 192
  %v825 = vld [vmem:[%s824] sm:$0xff]
  %v826 = vld [vmem:[%s824 + $0x8] sm:$0xff]
  %v827 = vld [vmem:[%s824 + $0x10] sm:$0xff]
  %v828 = vld [vmem:[%s824 + $0x18] sm:$0xff]
  %v829 = vld [vmem:[%s824 + $0x20] sm:$0xff]
  %v830 = vld [vmem:[%s824 + $0x28] sm:$0xff]
  %v831 = vld [vmem:[%s824 + $0x30] sm:$0xff]
  %v832 = vld [vmem:[%s824 + $0x38] sm:$0xff]
  %s833 = scalar_lea.vmem %s5, 3
  %v834 = vld [vmem:[%s833] sm:$0x1]
  %v836 = vlaneseq
  %v837 = vshrl.u32 %v836, 7
  %v838 = vsub.s32 0, %v837
  %v839 = vrot.slane %v834, %v838
  %v842 = vsel %vm178, %v823, 0
  %844 = vmatprep.subr.mxu0 0.0
  %845 = vmatpush1.msra.mxu0 0.0
  %846 = vmatprep.subr.mxu0 0.0
  %847 = vmatpush1.msra.mxu0 0.0
  %848 = vmatprep.subr.mxu0 0.0
  %849 = vmatpush1.msra.mxu0 0.0
  %850 = vmatprep.subr.mxu0 0.0
  %851 = vmatpush1.msra.mxu0 0.0
  %852 = vmatprep.subr.mxu0 0.0
  %853 = vmatpush1.msra.mxu0 0.0
  %854 = vmatprep.subr.mxu0 0.0
  %855 = vmatpush1.msra.mxu0 0.0
  %856 = vmatprep.subr.mxu0 0.0
  %857 = vmatpush1.msra.mxu0 0.0
  %858 = vmatprep.subr.mxu0 0.0
  %859 = vmatpush1.msra.mxu0 0.0
  %860 = vmatprep.subr.mxu0 0.0
  %861 = vmatpush1.msra.mxu0 %v832
  %862 = vmatprep.subr.mxu0 0.0
  %863 = vmatpush1.msra.mxu0 %v831
  %864 = vmatprep.subr.mxu0 0.0
  %865 = vmatpush1.msra.mxu0 %v830
  %866 = vmatprep.subr.mxu0 0.0
  %867 = vmatpush1.msra.mxu0 %v829
  %868 = vmatprep.subr.mxu0 0.0
  %869 = vmatpush1.msra.mxu0 %v828
  %870 = vmatprep.subr.mxu0 0.0
  %871 = vmatpush1.msra.mxu0 %v827
  %872 = vmatprep.subr.mxu0 0.0
  %873 = vmatpush1.msra.mxu0 %v826
  %874 = vmatprep.subr.mxu0 0.0
  %875 = vmatpush1.msra.mxu0 %v825
  %876 = vmatprep.subr.mxu0 0.0
  %877 = vmatpush2.msra.mxu0 0.0
  %878 = vmatprep.subr.mxu0 0.0
  %879 = vmatpush2.msra.mxu0 0.0
  %880 = vmatprep.subr.mxu0 0.0
  %881 = vmatpush2.msra.mxu0 0.0
  %882 = vmatprep.subr.mxu0 0.0
  %883 = vmatpush2.msra.mxu0 0.0
  %884 = vmatprep.subr.mxu0 0.0
  %885 = vmatpush2.msra.mxu0 0.0
  %886 = vmatprep.subr.mxu0 0.0
  %887 = vmatpush2.msra.mxu0 0.0
  %888 = vmatprep.subr.mxu0 0.0
  %889 = vmatpush2.msra.mxu0 0.0
  %890 = vmatprep.subr.mxu0 0.0
  %891 = vmatpush2.msra.mxu0 0.0
  %892 = vmatprep.subr.mxu0 0.0
  %893 = vmatpush2.msra.mxu0 0.0
  %894 = vmatprep.subr.mxu0 0.0
  %895 = vmatpush2.msra.mxu0 0.0
  %896 = vmatprep.subr.mxu0 0.0
  %897 = vmatpush2.msra.mxu0 0.0
  %898 = vmatprep.subr.mxu0 0.0
  %899 = vmatpush2.msra.mxu0 0.0
  %900 = vmatprep.subr.mxu0 0.0
  %901 = vmatpush2.msra.mxu0 0.0
  %902 = vmatprep.subr.mxu0 0.0
  %903 = vmatpush2.msra.mxu0 0.0
  %904 = vmatprep.subr.mxu0 0.0
  %905 = vmatpush2.msra.mxu0 0.0
  %906 = vmatprep.subr.mxu0 0.0
  %907 = vmatpush2.msra.mxu0 0.0
  %908 = vmatprep.mubr.f32.mxu0 0.0
  %909 = vmatmul.mubr.f32.gmra.mxu0 %v842
  %v910 = vpop.f32.mrf.mxu0
  %v911 = vadd.f32 %v839, %v910
  %v912 = vpop.f32.mrf.mxu0
  %913 = vdwg.mxu0
  %v914 = vmax.f32 %v911, 0.0
  %s915 = scalar_lea.vmem %s6, 6
  %v916 = vld [vmem:[%s915] sm:$0x3]
  %918 = vset.pattern.permute.xlu0 0
  %919 = vperm.xlu0 %918, %v916
  %v920 = vpop.permute.xlu0 %919
  %v922 = vadd.f32 %v914, %v920
  %s923 = sld [smem:[#allocation3 + $0x180]]
  %v924 = vstv %s923
  %vm925 = vcmp.eq.s32.totalorder %v59, %v924
  %vm926 = vcmp.eq.s32.totalorder %v60, %v924
  %v927 = vsel %vm925, 1, 0
  %v928 = vsel %vm926, 1, 0
  %vm929 = vcmp.eq.s32.totalorder %v927, 1
  %vm930 = vcmp.eq.s32.totalorder %v928, 1
  %v931 = vlaneseq
  %v932 = vshrl.u32 %v931, 7
  %v933 = vsub.s32 0, %v932
  %v934 = vrot.slane %v922, %v933
  %v935 = vsel %vm929, %v934, %v728
  %v936 = vsel %vm930, %v934, %v729
  %s937 = sld [smem:[#allocation3 + $0x181]]
  %v938 = vstv %s937
  %vm939 = vcmp.eq.s32.totalorder %v59, %v938
  %vm940 = vcmp.eq.s32.totalorder %v60, %v938
  %v941 = vsel %vm939, 1, 0
  %v942 = vsel %vm940, 1, 0
  %vm943 = vcmp.eq.s32.totalorder %v941, 1
  %vm944 = vcmp.eq.s32.totalorder %v942, 1
  %v945 = vlaneseq
  %v946 = vshrl.u32 %v945, 7
  %v947 = vsub.s32 1, %v946
  %v948 = vrot.slane %v922, %v947
  %v949 = vsel %vm943, %v948, %v935
  %v950 = vsel %vm944, %v948, %v936
  %s951 = sld [smem:[#allocation5]]
  %v952 = vstv %s951
  %v953 = vsel %vm63, %v952, 0
  %s954 = sld [smem:[#allocation5 + $0x1]]
  %v955 = vstv %s954
  %v956 = vsel %vm71, %v955, %v953
  %s957 = sld [smem:[#allocation5 + $0x2]]
  %v958 = vstv %s957
  %v959 = vsel %vm67, %v958, %v956
  %s960 = sld [smem:[#allocation5 + $0x3]]
  %v961 = vstv %s960
  %v962 = vsel %vm75, %v961, %v959
  %vm963 = vcmp.eq.s32.totalorder %v59, 4
  %s964 = sld [smem:[#allocation5 + $0x4]]
  %v965 = vstv %s964
  %v966 = vsel %vm963, %v965, %v962
  %vm967 = vcmp.eq.s32.totalorder %v59, 5
  %s968 = sld [smem:[#allocation5 + $0x5]]
  %v969 = vstv %s968
  %v970 = vsel %vm967, %v969, %v966
  %vm971 = vcmp.eq.s32.totalorder %v59, 6
  %s972 = sld [smem:[#allocation5 + $0x6]]
  %v973 = vstv %s972
  %v974 = vsel %vm971, %v973, %v970
  %vm975 = vcmp.eq.s32.totalorder %v59, 7
  %s976 = sld [smem:[#allocation5 + $0x7]]
  %v977 = vstv %s976
  %v978 = vsel %vm975, %v977, %v974
  %vm979 = vcmp.eq.s32.totalorder %v62, %v978
  %v980 = vsel %vm979, 1, 0
  %v981 = vcvt.s32.f32 %v980
  %v983 = vsel %vm82, %v981, 0
  %985 = vmatprep.subr.mxu0 0.0
  %986 = vmatpush1.msra.mxu0 0.0
  %987 = vmatprep.subr.mxu0 0.0
  %988 = vmatpush1.msra.mxu0 0.0
  %989 = vmatprep.subr.mxu0 0.0
  %990 = vmatpush1.msra.mxu0 0.0
  %991 = vmatprep.subr.mxu0 0.0
  %992 = vmatpush1.msra.mxu0 0.0
  %993 = vmatprep.subr.mxu0 0.0
  %994 = vmatpush1.msra.mxu0 0.0
  %995 = vmatprep.subr.mxu0 0.0
  %996 = vmatpush1.msra.mxu0 0.0
  %997 = vmatprep.subr.mxu0 0.0
  %998 = vmatpush1.msra.mxu0 0.0
  %999 = vmatprep.subr.mxu0 0.0
  %1000 = vmatpush1.msra.mxu0 0.0
  %1001 = vmatprep.subr.mxu0 0.0
  %1002 = vmatpush1.msra.mxu0 0.0
  %1003 = vmatprep.subr.mxu0 0.0
  %1004 = vmatpush1.msra.mxu0 0.0
  %1005 = vmatprep.subr.mxu0 0.0
  %1006 = vmatpush1.msra.mxu0 0.0
  %1007 = vmatprep.subr.mxu0 0.0
  %1008 = vmatpush1.msra.mxu0 0.0
  %1009 = vmatprep.subr.mxu0 0.0
  %1010 = vmatpush1.msra.mxu0 0.0
  %1011 = vmatprep.subr.mxu0 0.0
  %1012 = vmatpush1.msra.mxu0 0.0
  %1013 = vmatprep.subr.mxu0 0.0
  %1014 = vmatpush1.msra.mxu0 %v950
  %1015 = vmatprep.subr.mxu0 0.0
  %1016 = vmatpush1.msra.mxu0 %v949
  %1017 = vmatprep.subr.mxu0 0.0
  %1018 = vmatpush2.msra.mxu0 0.0
  %1019 = vmatprep.subr.mxu0 0.0
  %1020 = vmatpush2.msra.mxu0 0.0
  %1021 = vmatprep.subr.mxu0 0.0
  %1022 = vmatpush2.msra.mxu0 0.0
  %1023 = vmatprep.subr.mxu0 0.0
  %1024 = vmatpush2.msra.mxu0 0.0
  %1025 = vmatprep.subr.mxu0 0.0
  %1026 = vmatpush2.msra.mxu0 0.0
  %1027 = vmatprep.subr.mxu0 0.0
  %1028 = vmatpush2.msra.mxu0 0.0
  %1029 = vmatprep.subr.mxu0 0.0
  %1030 = vmatpush2.msra.mxu0 0.0
  %1031 = vmatprep.subr.mxu0 0.0
  %1032 = vmatpush2.msra.mxu0 0.0
  %1033 = vmatprep.subr.mxu0 0.0
  %1034 = vmatpush2.msra.mxu0 0.0
  %1035 = vmatprep.subr.mxu0 0.0
  %1036 = vmatpush2.msra.mxu0 0.0
  %1037 = vmatprep.subr.mxu0 0.0
  %1038 = vmatpush2.msra.mxu0 0.0
  %1039 = vmatprep.subr.mxu0 0.0
  %1040 = vmatpush2.msra.mxu0 0.0
  %1041 = vmatprep.subr.mxu0 0.0
  %1042 = vmatpush2.msra.mxu0 0.0
  %1043 = vmatprep.subr.mxu0 0.0
  %1044 = vmatpush2.msra.mxu0 0.0
  %1045 = vmatprep.subr.mxu0 0.0
  %1046 = vmatpush2.msra.mxu0 0.0
  %1047 = vmatprep.subr.mxu0 0.0
  %1048 = vmatpush2.msra.mxu0 0.0
  %1049 = vmatprep.mubr.f32.mxu0 0.0
  %1050 = vmatmul.mubr.f32.gmra.mxu0 %v983
  %v1051 = vpop.f32.mrf.mxu0
  %v1052 = vadd.f32 0.0, %v1051
  %v1053 = vpop.f32.mrf.mxu0
  %1054 = vdwg.mxu0
  %v1055 = vld [vmem:[%s7] sm:$0xff]
  %v1056 = vld [vmem:[%s7 + $0x8] sm:$0xff]
  %v1057 = vld [vmem:[%s7 + $0x10] sm:$0xff]
  %v1058 = vld [vmem:[%s7 + $0x18] sm:$0xff]
  %v1059 = vld [vmem:[#allocation6] sm:$0x1]
  %v1061 = vlaneseq
  %v1062 = vshrl.u32 %v1061, 7
  %v1063 = vsub.s32 0, %v1062
  %v1064 = vrot.slane %v1059, %v1063
  %v1067 = vsel %vm161, %v1052, 0
  %1069 = vmatprep.subr.mxu0 0.0
  %1070 = vmatpush1.msra.mxu0 0.0
  %1071 = vmatprep.subr.mxu0 0.0
  %1072 = vmatpush1.msra.mxu0 0.0
  %1073 = vmatprep.subr.mxu0 0.0
  %1074 = vmatpush1.msra.mxu0 0.0
  %1075 = vmatprep.subr.mxu0 0.0
  %1076 = vmatpush1.msra.mxu0 0.0
  %1077 = vmatprep.subr.mxu0 0.0
  %1078 = vmatpush1.msra.mxu0 0.0
  %1079 = vmatprep.subr.mxu0 0.0
  %1080 = vmatpush1.msra.mxu0 0.0
  %1081 = vmatprep.subr.mxu0 0.0
  %1082 = vmatpush1.msra.mxu0 0.0
  %1083 = vmatprep.subr.mxu0 0.0
  %1084 = vmatpush1.msra.mxu0 0.0
  %1085 = vmatprep.subr.mxu0 0.0
  %1086 = vmatpush1.msra.mxu0 0.0
  %1087 = vmatprep.subr.mxu0 0.0
  %1088 = vmatpush1.msra.mxu0 0.0
  %1089 = vmatprep.subr.mxu0 0.0
  %1090 = vmatpush1.msra.mxu0 0.0
  %1091 = vmatprep.subr.mxu0 0.0
  %1092 = vmatpush1.msra.mxu0 0.0
  %1093 = vmatprep.subr.mxu0 0.0
  %1094 = vmatpush1.msra.mxu0 %v1058
  %1095 = vmatprep.subr.mxu0 0.0
  %1096 = vmatpush1.msra.mxu0 %v1057
  %1097 = vmatprep.subr.mxu0 0.0
  %1098 = vmatpush1.msra.mxu0 %v1056
  %1099 = vmatprep.subr.mxu0 0.0
  %1100 = vmatpush1.msra.mxu0 %v1055
  %1101 = vmatprep.subr.mxu0 0.0
  %1102 = vmatpush2.msra.mxu0 0.0
  %1103 = vmatprep.subr.mxu0 0.0
  %1104 = vmatpush2.msra.mxu0 0.0
  %1105 = vmatprep.subr.mxu0 0.0
  %1106 = vmatpush2.msra.mxu0 0.0
  %1107 = vmatprep.subr.mxu0 0.0
  %1108 = vmatpush2.msra.mxu0 0.0
  %1109 = vmatprep.subr.mxu0 0.0
  %1110 = vmatpush2.msra.mxu0 0.0
  %1111 = vmatprep.subr.mxu0 0.0
  %1112 = vmatpush2.msra.mxu0 0.0
  %1113 = vmatprep.subr.mxu0 0.0
  %1114 = vmatpush2.msra.mxu0 0.0
  %1115 = vmatprep.subr.mxu0 0.0
  %1116 = vmatpush2.msra.mxu0 0.0
  %1117 = vmatprep.subr.mxu0 0.0
  %1118 = vmatpush2.msra.mxu0 0.0
  %1119 = vmatprep.subr.mxu0 0.0
  %1120 = vmatpush2.msra.mxu0 0.0
  %1121 = vmatprep.subr.mxu0 0.0
  %1122 = vmatpush2.msra.mxu0 0.0
  %1123 = vmatprep.subr.mxu0 0.0
  %1124 = vmatpush2.msra.mxu0 0.0
  %1125 = vmatprep.subr.mxu0 0.0
  %1126 = vmatpush2.msra.mxu0 0.0
  %1127 = vmatprep.subr.mxu0 0.0
  %1128 = vmatpush2.msra.mxu0 0.0
  %1129 = vmatprep.subr.mxu0 0.0
  %1130 = vmatpush2.msra.mxu0 0.0
  %1131 = vmatprep.subr.mxu0 0.0
  %1132 = vmatpush2.msra.mxu0 0.0
  %1133 = vmatprep.mubr.f32.mxu0 0.0
  %1134 = vmatmul.mubr.f32.gmra.mxu0 %v1067
  %v1135 = vpop.f32.mrf.mxu0
  %v1136 = vadd.f32 %v1064, %v1135
  %v1137 = vpop.f32.mrf.mxu0
  %1138 = vdwg.mxu0
  %v1139 = vld [vmem:[%s9] sm:$0xff]
  %v1140 = vld [vmem:[%s10] sm:$0xff]
  %v1141 = vld [vmem:[%s11] sm:$0xff]
  %v1142 = vld [vmem:[#allocation7] sm:$0x1]
  %vm1143 = vcmp.ge.f32.partialorder %v1136, 0.0
  %v1144 = vsel %vm1143, 1, 0
  %v1145 = vcvt.s32.f32 %v1144
  %v1146 = vmul.f32 %v1139, %v1145
  %vm1147 = vcmask 7168
  %v1148 = vsel %vm1147, %v1146, 0.0
  %1149 = vadd.xlane.f32.xlu0 %v1148
  %v1150 = vpop.xlane.xlu0 %1149
  %v1151 = vrot.slane %v1150, 4
  %v1152 = vadd.f32 %v1150, %v1151
  %v1153 = vrot.slane %v1152, 2
  %v1154 = vadd.f32 %v1152, %v1153
  %v1155 = vrot.slane %v1154, 1
  %v1156 = vadd.f32 %v1154, %v1155
  %s1157 = vtos %v1156
  %vm1158 = vcmp.lt.f32.partialorder %v1136, 0.0
  %v1159 = vsel %vm1158, 1, 0
  %v1160 = vcvt.s32.f32 %v1159
  %v1161 = vmul.f32 %v1140, %v1160
  %v1162 = vsel %vm1147, %v1161, 0.0
  %1163 = vadd.xlane.f32.xlu0 %v1162
  %v1164 = vpop.xlane.xlu0 %1163
  %v1165 = vrot.slane %v1164, 4
  %v1166 = vadd.f32 %v1164, %v1165
  %v1167 = vrot.slane %v1166, 2
  %v1168 = vadd.f32 %v1166, %v1167
  %v1169 = vrot.slane %v1168, 1
  %v1170 = vadd.f32 %v1168, %v1169
  %s1171 = vtos %v1170
  %v1173 = vlaneseq
  %v1174 = vshrl.u32 %v1173, 7
  %v1175 = vsub.s32 0, %v1174
  %v1176 = vrot.slane %v1142, %v1175
  %v1178 = vmul.f32 %v1176, %v1141
  %v1179 = vsub.f32 0.0, %v1136
  %v1180 = vmax.f32 %v1179, 0.0
  %v1181 = vand.u32 2147483647, %v1179
  %v1182 = vsub.f32 0.0, %v1181
  %v1183 = vmul.f32 %v1182, 1.442695
  %v1184 = vpow.pop %v1183
  %v1185 = vadd.f32 %v1184, 1.0
  %v1186 = vlog2.pop %v1185
  %v1187 = vmul.f32 %v1186, 0.6931472
  %v1188 = vadd.f32 %v1180, %v1187
  %v1189 = vmul.f32 %v1178, %v1188
  %v1190 = vsub.f32 1.0, %v1141
  %v1191 = vmax.f32 %v1136, 0.0
  %v1192 = vand.u32 2147483647, %v1136
  %v1193 = vsub.f32 0.0, %v1192
  %v1194 = vmul.f32 %v1193, 1.442695
  %v1195 = vpow.pop %v1194
  %v1196 = vadd.f32 %v1195, 1.0
  %v1197 = vlog2.pop %v1196
  %v1198 = vmul.f32 %v1197, 0.6931472
  %v1199 = vadd.f32 %v1191, %v1198
  %v1200 = vmul.f32 %v1190, %v1199
  %v1201 = vadd.f32 %v1189, %v1200
  %v1202 = vadd.f32 %v1139, %v1140
  %v1203 = vmul.f32 %v1202, %v1201
  %v1204 = vsel %vm1147, %v1203, 0.0
  %1205 = vadd.xlane.f32.xlu0 %v1204
  %v1206 = vpop.xlane.xlu0 %1205
  %v1207 = vrot.slane %v1206, 4
  %v1208 = vadd.f32 %v1206, %v1207
  %v1209 = vrot.slane %v1208, 2
  %v1210 = vadd.f32 %v1208, %v1209
  %v1211 = vrot.slane %v1210, 1
  %v1212 = vadd.f32 %v1210, %v1211
  %s1213 = vtos %v1212
  %vm1214 = vcmp.eq.s32.totalorder %v62, 0
  %vm1215 = vcmp.eq.s32.totalorder %v62, 1
  %vm1216 = vcmp.eq.s32.totalorder %v62, 2
  %v1217 = vstv %s1171
  %v1218 = vsel %vm1216, %v1217, 0.0
  %v1219 = vstv %s1157
  %v1220 = vsel %vm1215, %v1219, %v1218
  %v1221 = vstv %s1213
  %v1222 = vsel %vm1214, %v1221, %v1220
  %vm1223 = vcmask 57344
  %1224 = vst.msk [vmem:[%s13] sm:$0x1] %vm1223, %v1222
  // Predicated region
  $region42: #{learning_model_forward.1} parent=0 // pred_check
    _
  $region43: #{learning_model_forward.1} parent=0 // pred_check_branch
    %1226 = sbr.rel (0) target = $region45
  $region44: #{learning_model_forward.1} parent=0 // pred_region
    _
  $region45: #{learning_model_forward.1} parent=0 // pred_fallthru
    _
  // Predicated region
  $region46: #{learning_model_forward.1} parent=0 // pred_check
    _
  $region47: #{learning_model_forward.1} parent=0 // pred_check_branch
    %1228 = sbr.rel (0) target = $region49
  $region48: #{learning_model_forward.1} parent=0 // pred_region
    _
  $region49: #{learning_model_forward.1} parent=0 // pred_fallthru
    _

</llo_original>
